<compile_context>
chip_gen: v5e
topology: v5e:2x2
jax: 0.10.0
libtpu: 0.0.40
codegen_flags: <defaults>
</compile_context>

<pallas_src>
import jax
import jax.numpy as jnp
from jax import lax
from jax.experimental import pallas as pl
from jax.experimental.pallas import tpu as pltpu


def mlp_kernel(x_ref, w1_ref, b1_ref, w2_ref, b2_ref, o_ref):
    # x:  [TILE_B, D_in] bf16   streamed per batch tile (double-buffered DMA)
    # w1: [D_in, H] bf16, b1: [1, H] f32      VMEM-resident (single-buffered)
    # w2: [1, H] f32   gamma-folded final-linear weights, VMEM-resident
    # b2: [1, 1] f32   beta/bias-folded final scalar, SMEM
    # o:  [1, TILE_B] f32   lane-dense output row for this tile

    # Linear 1 + ReLU: bf16 MXU matmul with f32 accumulation.
    h = jnp.dot(x_ref[...], w1_ref[...], preferred_element_type=jnp.float32)
    h = jnp.maximum(h + b1_ref[...], 0.0)

    # LayerNorm (eps=1e-5); affine folded into the final linear.  The
    # normalized tensor is never materialized: the final Linear(H, 1) is
    # applied to the centered activations and the rsqrt scale is hoisted out
    # of the lane reduction:  out = rsqrt(var+eps) * sum(ctr * w2) + b2.
    mean = jnp.mean(h, axis=-1, keepdims=True)
    ctr = h - mean
    var = jnp.mean(ctr * ctr, axis=-1, keepdims=True)
    inv = lax.rsqrt(var + 1e-5)                                   # [TILE_B, 1]

    # Dropout(0.1): identity in eval mode.
    # TODO(synk): training-mode dropout (pltpu.prng_random_bits mask) not implemented.

    # Linear 2 (output_size == 1) as VPU multiply + lane reduce; lane-dense
    # (1, TILE_B) store (sublane->lane relayout of a [TILE_B] vector is tiny).
    dot_w = jnp.sum(ctr * w2_ref[...], axis=-1, keepdims=True)    # [TILE_B, 1]
    out = inv * dot_w + b2_ref[0, 0]                              # [TILE_B, 1]
    o_ref[...] = out.reshape(1, -1)


def _physical_vmem_bytes():
    """Best-effort physical VMEM query; conservative (v7x, 64 MiB) fallback."""
    try:
        info = pltpu.get_tpu_info()
        return int(getattr(info, "vmem_capacity_bytes", 64 * 1024 * 1024))
    except Exception:
        return 64 * 1024 * 1024


def _choose_tiling(B, D_in, H, x_itemsize, vmem_budget):
    """Derive TILE_B from the VMEM budget; keep the parallel grid axis even."""
    # Resident params: w1 counted double-buffered to stay safe even if the
    # single-buffer (pl.Buffered(1)) request is not honoured; b1/w2_eff tiny.
    resident = 2 * D_in * H * x_itemsize + 4 * H * 4 + 4096
    # Per streamed row: double-buffered bf16 x block + f32 body temporaries
    # (h / centered / products) + double-buffered lane-dense f32 output.
    per_row = 2 * D_in * x_itemsize + 4 * H * 4 + 2 * 4
    avail = vmem_budget - resident - (2 << 20)
    tile_b = (max(avail, per_row * 256) // per_row) // 256 * 256
    tile_b = int(max(256, min(8192, tile_b)))
    # Never wider than the 128-padded batch.
    tile_b = max(128, min(tile_b, pl.cdiv(max(B, 1), 128) * 128))
    num_tiles = pl.cdiv(B, tile_b)
    # v7x megacore: keep the "parallel" batch axis even so both TCs get work.
    if num_tiles > 1 and num_tiles % 2 == 1:
        tile_b = max(128, pl.cdiv(pl.cdiv(B, num_tiles + 1), 128) * 128)
        num_tiles = pl.cdiv(B, tile_b)
        if num_tiles > 1 and num_tiles % 2 == 1:
            num_tiles += 1   # one pure-padding tile; keeps both cores balanced
    return int(tile_b), int(num_tiles)


def mlp_forward(x, params):
    """x: [B, S, F] or [B, D_in] -> returns [B] float32 (matches .squeeze(-1))."""
    if x.ndim == 3:
        b, s, f = x.shape
        x = x.reshape(b, s * f)
    B, D_in = x.shape
    w1, b1, gamma, beta, w2, b2 = params
    H = w1.shape[1]

    # Fold the LayerNorm affine into the final linear (exact algebra, f32):
    #   (n*gamma + beta) @ w2 + b2  ==  n @ (gamma * w2) + (beta . w2 + b2)
    w2_row = jnp.reshape(w2[:, 0], (1, H)).astype(jnp.float32)                # [1, H]
    w2_eff = gamma.astype(jnp.float32).reshape(1, H) * w2_row                 # [1, H]
    b2_eff = (jnp.sum(beta.astype(jnp.float32).reshape(1, H) * w2_row)
              + b2.reshape(()).astype(jnp.float32)).reshape(1, 1)             # [1, 1]

    # bf16 for the HBM-dominant operands (x stream + resident w1); MXU
    # accumulates in f32, LayerNorm / epilogue math stays f32.
    x_bf16 = x.astype(jnp.bfloat16)
    w1_bf16 = w1.astype(jnp.bfloat16)
    b1_f32 = b1.reshape(1, H).astype(jnp.float32)
    x_itemsize = jnp.dtype(jnp.bfloat16).itemsize

    phys_vmem = _physical_vmem_bytes()
    # ~96 MiB on 128 MiB parts (v5e/v6e), ~48 MiB on v7x (64 MiB per TC).
    vmem_limit = int(min(100 * 1024 * 1024, phys_vmem * 3 // 4))
    tile_b, num_tiles = _choose_tiling(B, D_in, H, x_itemsize, vmem_limit)
    b_pad = num_tiles * tile_b
    if b_pad != B:
        x_bf16 = jnp.pad(x_bf16, ((0, b_pad - B), (0, 0)))

    cost = pl.CostEstimate(
        flops=2 * b_pad * D_in * H + 10 * b_pad * H,
        transcendentals=b_pad,                      # one rsqrt per row
        bytes_accessed=(b_pad * D_in * x_itemsize   # streamed x
                        + D_in * H * x_itemsize + 2 * H * 4 + 4   # params
                        + b_pad * 4),               # lane-dense output
    )

    def run(single_buffer_weights):
        resident_kwargs = (
            {"pipeline_mode": pl.Buffered(1)} if single_buffer_weights else {})
        return pl.pallas_call(
            mlp_kernel,
            out_shape=jax.ShapeDtypeStruct((num_tiles, tile_b), jnp.float32),
            grid_spec=pltpu.PrefetchScalarGridSpec(
                num_scalar_prefetch=0,
                grid=(num_tiles,),
                in_specs=[
                    pl.BlockSpec((tile_b, D_in), lambda i: (i, 0)),              # x: streamed
                    pl.BlockSpec((D_in, H), lambda i: (0, 0), **resident_kwargs),  # w1
                    pl.BlockSpec((1, H), lambda i: (0, 0), **resident_kwargs),     # b1
                    pl.BlockSpec((1, H), lambda i: (0, 0), **resident_kwargs),     # w2_eff
                    pl.BlockSpec(memory_space=pltpu.MemorySpace.SMEM),           # b2_eff
                ],
                out_specs=pl.BlockSpec((1, tile_b), lambda i: (i, 0)),           # lane-dense
            ),
            compiler_params=pltpu.CompilerParams(
                dimension_semantics=("parallel",),   # batch tiles shard across TCs on v7x
                vmem_limit_bytes=vmem_limit,
            ),
            cost_estimate=cost,
        )(x_bf16, w1_bf16, b1_f32, w2_eff, b2_eff)

    try:
        out = run(single_buffer_weights=True)
    except Exception:
        # Fallback if this jax build rejects pl.Buffered(1) on pallas_call
        # BlockSpecs (only cost: one extra resident copy of w1).
        out = run(single_buffer_weights=False)

    return out.reshape(-1)[:B]


def init_params(key, input_size, hidden_size, output_size=1):
    """Deterministic synthetic parameters (PyTorch-like uniform fan-in init)."""
    k1, k2, k3, k4 = jax.random.split(key, 4)
    lim1 = 1.0 / jnp.sqrt(input_size)
    lim2 = 1.0 / jnp.sqrt(hidden_size)
    w1 = jax.random.uniform(k1, (input_size, hidden_size), jnp.float32, -lim1, lim1)
    b1 = jax.random.uniform(k2, (1, hidden_size), jnp.float32, -lim1, lim1)
    gamma = jnp.ones((1, hidden_size), jnp.float32)   # LayerNorm weight init
    beta = jnp.zeros((1, hidden_size), jnp.float32)   # LayerNorm bias init
    w2 = jax.random.uniform(k3, (hidden_size, output_size), jnp.float32, -lim2, lim2)
    b2 = jax.random.uniform(k4, (1, output_size), jnp.float32, -lim2, lim2)
    return (w1, b1, gamma, beta, w2, b2)


if __name__ == "__main__":
    # Small shapes consistent with the forward pass: x is [batch, seq, features]
    batch, seq, feat = 2, 8, 4
    input_size = seq * feat          # 32 (flattened in forward)
    hidden_size = 32
    output_size = 1

    key = jax.random.PRNGKey(0)
    kx, kp = jax.random.split(key)
    x = jax.random.normal(kx, (batch, seq, feat), jnp.float32)
    params = init_params(kp, input_size, hidden_size, output_size)

    y = mlp_forward(x, params)
    jax.block_until_ready(y)
    assert y.shape == (batch,), y.shape

    # Pure-JAX f32 reference of the original (un-fused) module math.
    x2 = x.reshape(batch, seq * feat)
    w1, b1, gamma, beta, w2, b2 = params
    h = jnp.maximum(x2 @ w1 + b1, 0.0)
    mu = h.mean(-1, keepdims=True)
    var = ((h - mu) ** 2).mean(-1, keepdims=True)
    h = (h - mu) * lax.rsqrt(var + 1e-5) * gamma + beta
    y_ref = (h @ w2 + b2)[:, 0]
    # Tolerance loosened vs. pure f32: the kernel streams x / w1 in bfloat16
    # (f32 MXU accumulate); LayerNorm and the final reduce remain f32.
    assert jnp.allclose(y, y_ref, atol=3e-2, rtol=3e-2), (y, y_ref)

    print("KERNEL_OK")
</pallas_src>

<mosaic_0001>
module attributes {stable_mosaic.version = 11 : i64} {
  func.func @mlp_kernel(%arg0: i32, %arg1: memref<128x32xbf16, #tpu.memory_space<vmem>>, %arg2: memref<32x32xbf16, #tpu.memory_space<vmem>>, %arg3: memref<1x32xf32, #tpu.memory_space<vmem>>, %arg4: memref<1x32xf32, #tpu.memory_space<vmem>>, %arg5: memref<1x1xf32, #tpu.memory_space<smem>>, %arg6: memref<1x128xf32, #tpu.memory_space<vmem>>) attributes {dimension_semantics = [#tpu.dimension_semantics<parallel>], iteration_bounds = array<i64: 1>, scalar_prefetch = 0 : i64, scratch_operands = 0 : i64, tpu.core_type = #tpu.core_type<tc>, window_params = [{transform_indices = @transform_0, window_bounds = array<i64: 128, 32>}, {pipeline_mode = #tpu.pipeline_mode<synchronous>, transform_indices = @transform_1, window_bounds = array<i64: 32, 32>}, {pipeline_mode = #tpu.pipeline_mode<synchronous>, transform_indices = @transform_2, window_bounds = array<i64: 1, 32>}, {pipeline_mode = #tpu.pipeline_mode<synchronous>, transform_indices = @transform_3, window_bounds = array<i64: 1, 32>}, {transform_indices = @transform_4, window_bounds = array<i64: 1, 1>}, {transform_indices = @transform_5, window_bounds = array<i64: 1, 128>}]} {
    %c0 = arith.constant 0 : index
    %c0_0 = arith.constant 0 : index
    %0 = vector.load %arg1[%c0, %c0_0] : memref<128x32xbf16, #tpu.memory_space<vmem>>, vector<128x32xbf16>
    %c0_1 = arith.constant 0 : index
    %c0_2 = arith.constant 0 : index
    %1 = vector.load %arg2[%c0_1, %c0_2] : memref<32x32xbf16, #tpu.memory_space<vmem>>, vector<32x32xbf16>
    %cst = arith.constant dense<0.000000e+00> : vector<128x32xf32>
    %2 = tpu.matmul %0, %1, %cst {dimension_numbers = #tpu.dot_dimension_numbers<[1], [0], [0], [1], [0, 0, 1, 1], [], []>} : vector<128x32xbf16>, vector<32x32xbf16>, vector<128x32xf32> -> vector<128x32xf32>
    %c0_3 = arith.constant 0 : index
    %c0_4 = arith.constant 0 : index
    %3 = vector.load %arg3[%c0_3, %c0_4] : memref<1x32xf32, #tpu.memory_space<vmem>>, vector<1x32xf32>
    %4 = vector.broadcast %3 : vector<1x32xf32> to vector<128x32xf32>
    %5 = arith.addf %2, %4 : vector<128x32xf32>
    %cst_5 = arith.constant 0.000000e+00 : f32
    %6 = vector.broadcast %cst_5 : f32 to vector<128x32xf32>
    %7 = arith.maximumf %5, %6 : vector<128x32xf32>
    %cst_6 = arith.constant dense<0.000000e+00> : vector<128xf32>
    %8 = vector.multi_reduction <add>, %7, %cst_6 [1] : vector<128x32xf32> to vector<128xf32>
    %9 = vector.shape_cast %8 : vector<128xf32> to vector<128x1xf32>
    %cst_7 = arith.constant 3.200000e+01 : f32
    %10 = vector.broadcast %cst_7 : f32 to vector<128x1xf32>
    %11 = arith.divf %9, %10 : vector<128x1xf32>
    %12 = vector.broadcast %11 : vector<128x1xf32> to vector<128x32xf32>
    %13 = arith.subf %7, %12 : vector<128x32xf32>
    %14 = arith.mulf %13, %13 : vector<128x32xf32>
    %cst_8 = arith.constant dense<0.000000e+00> : vector<128xf32>
    %15 = vector.multi_reduction <add>, %14, %cst_8 [1] : vector<128x32xf32> to vector<128xf32>
    %16 = vector.shape_cast %15 : vector<128xf32> to vector<128x1xf32>
    %cst_9 = arith.constant 3.200000e+01 : f32
    %17 = vector.broadcast %cst_9 : f32 to vector<128x1xf32>
    %18 = arith.divf %16, %17 : vector<128x1xf32>
    %cst_10 = arith.constant 9.99999974E-6 : f32
    %19 = vector.broadcast %cst_10 : f32 to vector<128x1xf32>
    %20 = arith.addf %18, %19 : vector<128x1xf32>
    %21 = math.rsqrt %20 : vector<128x1xf32>
    %c0_11 = arith.constant 0 : index
    %c0_12 = arith.constant 0 : index
    %22 = vector.load %arg4[%c0_11, %c0_12] : memref<1x32xf32, #tpu.memory_space<vmem>>, vector<1x32xf32>
    %23 = vector.broadcast %22 : vector<1x32xf32> to vector<128x32xf32>
    %24 = arith.mulf %13, %23 : vector<128x32xf32>
    %cst_13 = arith.constant dense<0.000000e+00> : vector<128xf32>
    %25 = vector.multi_reduction <add>, %24, %cst_13 [1] : vector<128x32xf32> to vector<128xf32>
    %26 = vector.shape_cast %25 : vector<128xf32> to vector<128x1xf32>
    %27 = arith.mulf %21, %26 : vector<128x1xf32>
    %c0_14 = arith.constant 0 : index
    %c0_15 = arith.constant 0 : index
    %28 = memref.load %arg5[%c0_14, %c0_15] : memref<1x1xf32, #tpu.memory_space<smem>>
    %29 = vector.broadcast %28 : f32 to vector<128x1xf32>
    %30 = arith.addf %27, %29 : vector<128x1xf32>
    %31 = vector.shape_cast %30 : vector<128x1xf32> to vector<1x128xf32>
    %c0_16 = arith.constant 0 : index
    %c0_17 = arith.constant 0 : index
    %32 = vector.load %arg6[%c0_16, %c0_17] : memref<1x128xf32, #tpu.memory_space<vmem>>, vector<1x128xf32>
    tpu.vector_store %arg6[%c0_16, %c0_17], %31 {strides = array<i32>} : memref<1x128xf32, #tpu.memory_space<vmem>>, vector<1x128xf32>,
    return
  }
  func.func @transform_0(%arg0: i32) -> (i32, i32) {
    %c0_i32 = arith.constant 0 : i32
    %c0_i32_0 = arith.constant 0 : i32
    return %arg0, %c0_i32 : i32, i32
  }
  func.func @transform_1(%arg0: i32) -> (i32, i32) {
    %c0_i32 = arith.constant 0 : i32
    %c0_i32_0 = arith.constant 0 : i32
    %c0_i32_1 = arith.constant 0 : i32
    return %c0_i32, %c0_i32_0 : i32, i32
  }
  func.func @transform_2(%arg0: i32) -> (i32, i32) {
    %c0_i32 = arith.constant 0 : i32
    %c0_i32_0 = arith.constant 0 : i32
    %c0_i32_1 = arith.constant 0 : i32
    return %c0_i32, %c0_i32_0 : i32, i32
  }
  func.func @transform_3(%arg0: i32) -> (i32, i32) {
    %c0_i32 = arith.constant 0 : i32
    %c0_i32_0 = arith.constant 0 : i32
    %c0_i32_1 = arith.constant 0 : i32
    return %c0_i32, %c0_i32_0 : i32, i32
  }
  func.func @transform_4(%arg0: i32) -> (i32, i32) {
    %c0_i32 = arith.constant 0 : i32
    %c0_i32_0 = arith.constant 0 : i32
    %c0_i32_1 = arith.constant 0 : i32
    return %c0_i32, %c0_i32_0 : i32, i32
  }
  func.func @transform_5(%arg0: i32) -> (i32, i32) {
    %c0_i32 = arith.constant 0 : i32
    %c0_i32_0 = arith.constant 0 : i32
    return %arg0, %c0_i32 : i32, i32
  }
}

module attributes {stable_mosaic.version = 11 : i64} {
  func.func @mlp_kernel(%arg0: i32, %arg1: memref<128x32xbf16, #tpu.memory_space<vmem>>, %arg2: memref<32x32xbf16, #tpu.memory_space<vmem>>, %arg3: memref<1x32xf32, #tpu.memory_space<vmem>>, %arg4: memref<1x32xf32, #tpu.memory_space<vmem>>, %arg5: memref<1x1xf32, #tpu.memory_space<smem>>, %arg6: memref<1x128xf32, #tpu.memory_space<vmem>>) attributes {dimension_semantics = [#tpu.dimension_semantics<parallel>], iteration_bounds = array<i64: 1>, scalar_prefetch = 0 : i64, scratch_operands = 0 : i64, tpu.core_type = #tpu.core_type<tc>, window_params = [{transform_indices = @transform_0, window_bounds = array<i64: 128, 32>}, {pipeline_mode = #tpu.pipeline_mode<synchronous>, transform_indices = @transform_1, window_bounds = array<i64: 32, 32>}, {pipeline_mode = #tpu.pipeline_mode<synchronous>, transform_indices = @transform_2, window_bounds = array<i64: 1, 32>}, {pipeline_mode = #tpu.pipeline_mode<synchronous>, transform_indices = @transform_3, window_bounds = array<i64: 1, 32>}, {transform_indices = @transform_4, window_bounds = array<i64: 1, 1>}, {transform_indices = @transform_5, window_bounds = array<i64: 1, 128>}]} {
    %c0 = arith.constant 0 : index
    %c0_0 = arith.constant 0 : index
    %0 = vector.load %arg1[%c0, %c0_0] : memref<128x32xbf16, #tpu.memory_space<vmem>>, vector<128x32xbf16>
    %c0_1 = arith.constant 0 : index
    %c0_2 = arith.constant 0 : index
    %1 = vector.load %arg2[%c0_1, %c0_2] : memref<32x32xbf16, #tpu.memory_space<vmem>>, vector<32x32xbf16>
    %cst = arith.constant dense<0.000000e+00> : vector<128x32xf32>
    %2 = tpu.matmul %0, %1, %cst {dimension_numbers = #tpu.dot_dimension_numbers<[1], [0], [0], [1], [0, 0, 1, 1], [], []>} : vector<128x32xbf16>, vector<32x32xbf16>, vector<128x32xf32> -> vector<128x32xf32>
    %c0_3 = arith.constant 0 : index
    %c0_4 = arith.constant 0 : index
    %3 = vector.load %arg3[%c0_3, %c0_4] : memref<1x32xf32, #tpu.memory_space<vmem>>, vector<1x32xf32>
    %4 = vector.broadcast %3 : vector<1x32xf32> to vector<128x32xf32>
    %5 = arith.addf %2, %4 : vector<128x32xf32>
    %cst_5 = arith.constant 0.000000e+00 : f32
    %6 = vector.broadcast %cst_5 : f32 to vector<128x32xf32>
    %7 = arith.maximumf %5, %6 : vector<128x32xf32>
    %cst_6 = arith.constant dense<0.000000e+00> : vector<128xf32>
    %8 = vector.multi_reduction <add>, %7, %cst_6 [1] : vector<128x32xf32> to vector<128xf32>
    %9 = vector.shape_cast %8 : vector<128xf32> to vector<128x1xf32>
    %cst_7 = arith.constant 3.200000e+01 : f32
    %10 = vector.broadcast %cst_7 : f32 to vector<128x1xf32>
    %11 = arith.divf %9, %10 : vector<128x1xf32>
    %12 = vector.broadcast %11 : vector<128x1xf32> to vector<128x32xf32>
    %13 = arith.subf %7, %12 : vector<128x32xf32>
    %14 = arith.mulf %13, %13 : vector<128x32xf32>
    %cst_8 = arith.constant dense<0.000000e+00> : vector<128xf32>
    %15 = vector.multi_reduction <add>, %14, %cst_8 [1] : vector<128x32xf32> to vector<128xf32>
    %16 = vector.shape_cast %15 : vector<128xf32> to vector<128x1xf32>
    %cst_9 = arith.constant 3.200000e+01 : f32
    %17 = vector.broadcast %cst_9 : f32 to vector<128x1xf32>
    %18 = arith.divf %16, %17 : vector<128x1xf32>
    %cst_10 = arith.constant 9.99999974E-6 : f32
    %19 = vector.broadcast %cst_10 : f32 to vector<128x1xf32>
    %20 = arith.addf %18, %19 : vector<128x1xf32>
    %21 = math.rsqrt %20 : vector<128x1xf32>
    %c0_11 = arith.constant 0 : index
    %c0_12 = arith.constant 0 : index
    %22 = vector.load %arg4[%c0_11, %c0_12] : memref<1x32xf32, #tpu.memory_space<vmem>>, vector<1x32xf32>
    %23 = vector.broadcast %22 : vector<1x32xf32> to vector<128x32xf32>
    %24 = arith.mulf %13, %23 : vector<128x32xf32>
    %cst_13 = arith.constant dense<0.000000e+00> : vector<128xf32>
    %25 = vector.multi_reduction <add>, %24, %cst_13 [1] : vector<128x32xf32> to vector<128xf32>
    %26 = vector.shape_cast %25 : vector<128xf32> to vector<128x1xf32>
    %27 = arith.mulf %21, %26 : vector<128x1xf32>
    %c0_14 = arith.constant 0 : index
    %c0_15 = arith.constant 0 : index
    %28 = memref.load %arg5[%c0_14, %c0_15] : memref<1x1xf32, #tpu.memory_space<smem>>
    %29 = vector.broadcast %28 : f32 to vector<128x1xf32>
    %30 = arith.addf %27, %29 : vector<128x1xf32>
    %31 = vector.shape_cast %30 : vector<128x1xf32> to vector<1x128xf32>
    %c0_16 = arith.constant 0 : index
    %c0_17 = arith.constant 0 : index
    %32 = vector.load %arg6[%c0_16, %c0_17] : memref<1x128xf32, #tpu.memory_space<vmem>>, vector<1x128xf32>
    tpu.vector_store %arg6[%c0_16, %c0_17], %31 {strides = array<i32>} : memref<1x128xf32, #tpu.memory_space<vmem>>, vector<1x128xf32>,
    return
  }
  func.func @transform_0(%arg0: i32) -> (i32, i32) {
    %c0_i32 = arith.constant 0 : i32
    %c0_i32_0 = arith.constant 0 : i32
    return %arg0, %c0_i32 : i32, i32
  }
  func.func @transform_1(%arg0: i32) -> (i32, i32) {
    %c0_i32 = arith.constant 0 : i32
    %c0_i32_0 = arith.constant 0 : i32
    %c0_i32_1 = arith.constant 0 : i32
    return %c0_i32, %c0_i32_0 : i32, i32
  }
  func.func @transform_2(%arg0: i32) -> (i32, i32) {
    %c0_i32 = arith.constant 0 : i32
    %c0_i32_0 = arith.constant 0 : i32
    %c0_i32_1 = arith.constant 0 : i32
    return %c0_i32, %c0_i32_0 : i32, i32
  }
  func.func @transform_3(%arg0: i32) -> (i32, i32) {
    %c0_i32 = arith.constant 0 : i32
    %c0_i32_0 = arith.constant 0 : i32
    %c0_i32_1 = arith.constant 0 : i32
    return %c0_i32, %c0_i32_0 : i32, i32
  }
  func.func @transform_4(%arg0: i32) -> (i32, i32) {
    %c0_i32 = arith.constant 0 : i32
    %c0_i32_0 = arith.constant 0 : i32
    %c0_i32_1 = arith.constant 0 : i32
    return %c0_i32, %c0_i32_0 : i32, i32
  }
  func.func @transform_5(%arg0: i32) -> (i32, i32) {
    %c0_i32 = arith.constant 0 : i32
    %c0_i32_0 = arith.constant 0 : i32
    return %arg0, %c0_i32 : i32, i32
  }
}

</mosaic_0001>

<llo_original>
// kernel: tpu_custom_call.1
$region0: #{tpu_custom_call.1}
  #allocation0 [shape = 'u32[]', space=smem, size = 0x4, offset = 0x4, fixed_abs, tag = 'smem constant byte address 0x4 - core index']
  #allocation1 [shape = 'u32[72,128]{1,0:T(1,128)}', space=vmem, size = 0x9000, scoped, tag = 'internal scratch']
  #allocation2 [shape = 'f32[1,1]{1,0:T(1,128)S(6)}', space=smem, size = 0x200, scoped, tag = 'scoped memory for tpu_custom_call.1']
  %s0 = inlined_call_operand.vmem [shape: bf16[128,32], index: 0, kind: input, shape index: {}]
  %s1 = inlined_call_operand.vmem [shape: bf16[32,32], index: 1, kind: input, shape index: {}]
  %s2 = inlined_call_operand.vmem [shape: f32[1,32], index: 2, kind: input, shape index: {}]
  %s3 = inlined_call_operand.vmem [shape: f32[1,32], index: 3, kind: input, shape index: {}]
  %s4 = inlined_call_operand.<no memory space> [shape: f32[1,1], index: 4, kind: input, shape index: {}]
  %s5 = inlined_call_operand.hbm [shape: f32[1,128], index: 5, kind: output, shape index: {}]
  %s6 = sld [smem:[#allocation0]]
  $region30: #{tpu_custom_call.1} parent=0
    _
  %s8 = ssub.s32 1, %s6
  %s9 = scalar_select 0, %s8, %s6
  %10 = sst [smem:[#allocation2]] %s4
  $region1: #{tpu_custom_call.1} parent=0
    #allocation3 [shape = 'u8[512]{0}', space=vmem, size = 0x400, scoped, tag = 'output window, operand 0, single buffered']
    #allocation4 [shape = 's32[1]{0}', space=sflag, size = 0x4, scoped, tag = 'scoped memory for tpu_custom_call.1']
    %11 = vsyncpa [#allocation4], 0
    // Predicated region
    $region2: #{tpu_custom_call.1} parent=1 // pred_check
      _
    $region3: #{tpu_custom_call.1} parent=1 // pred_check_branch
      %13 = sbr.rel (0) target = $region5
    $region4: #{tpu_custom_call.1} parent=1 // pred_region
      _
    $region5: #{tpu_custom_call.1} parent=1 // pred_fallthru
      _
    // Predicated region
    $region6: #{tpu_custom_call.1} parent=1 // pred_check
      _
    $region7: #{tpu_custom_call.1} parent=1 // pred_check_branch
      %15 = sbr.rel (0) target = $region9
    $region8: #{tpu_custom_call.1} parent=1 // pred_region
      _
    $region9: #{tpu_custom_call.1} parent=1 // pred_fallthru
      _
    // Predicated region
    $region10: #{tpu_custom_call.1} parent=1 // pred_check
      _
    $region11: #{tpu_custom_call.1} parent=1 // pred_check_branch
      %17 = sbr.rel (0) target = $region13
    $region12: #{tpu_custom_call.1} parent=1 // pred_region
      _
    $region13: #{tpu_custom_call.1} parent=1 // pred_fallthru
      _
    // Predicated region
    $region14: #{tpu_custom_call.1} parent=1 // pred_check
      _
    $region15: #{tpu_custom_call.1} parent=1 // pred_check_branch
      %19 = sbr.rel (0) target = $region17
    $region16: #{tpu_custom_call.1} parent=1 // pred_region
      _
    $region17: #{tpu_custom_call.1} parent=1 // pred_fallthru
      _
    // Predicated region
    $region18: #{tpu_custom_call.1} parent=1 // pred_check
      _
    $region19: #{tpu_custom_call.1} parent=1 // pred_check_branch
      %21 = sbr.rel (0) target = $region21
    $region20: #{tpu_custom_call.1} parent=1 // pred_region
      _
    $region21: #{tpu_custom_call.1} parent=1 // pred_fallthru
      _
    %v23 = vld [vmem:[%s0] sm:$0xf]
    %v24 = vld [vmem:[%s0 + $0x4] sm:$0xf]
    %v25 = vld [vmem:[%s0 + $0x8] sm:$0xf]
    %v26 = vld [vmem:[%s0 + $0xc] sm:$0xf]
    %v27 = vld [vmem:[%s0 + $0x10] sm:$0xf]
    %v28 = vld [vmem:[%s0 + $0x14] sm:$0xf]
    %v29 = vld [vmem:[%s0 + $0x18] sm:$0xf]
    %v30 = vld [vmem:[%s0 + $0x1c] sm:$0xf]
    %v31 = vld [vmem:[%s0 + $0x20] sm:$0xf]
    %v32 = vld [vmem:[%s0 + $0x24] sm:$0xf]
    %v33 = vld [vmem:[%s0 + $0x28] sm:$0xf]
    %v34 = vld [vmem:[%s0 + $0x2c] sm:$0xf]
    %v35 = vld [vmem:[%s0 + $0x30] sm:$0xf]
    %v36 = vld [vmem:[%s0 + $0x34] sm:$0xf]
    %v37 = vld [vmem:[%s0 + $0x38] sm:$0xf]
    %v38 = vld [vmem:[%s0 + $0x3c] sm:$0xf]
    %v39 = vld [vmem:[%s1] sm:$0xf]
    %v40 = vld [vmem:[%s1 + $0x4] sm:$0xf]
    %v41 = vld [vmem:[%s1 + $0x8] sm:$0xf]
    %v42 = vld [vmem:[%s1 + $0xc] sm:$0xf]
    %v43 = vld [vmem:[%s2] sm:$0x1]
    %v45 = vperm.slane %v43, 0
    %v63 = vunpack.c.l.b16 %v23
    %v64 = vunpack.c.l.b16 %v24
    %v65 = vunpack.c.l.b16 %v25
    %v66 = vunpack.c.l.b16 %v26
    %v67 = vunpack.c.l.b16 %v27
    %v68 = vunpack.c.l.b16 %v28
    %v69 = vunpack.c.l.b16 %v29
    %v70 = vunpack.c.l.b16 %v30
    %v71 = vunpack.c.l.b16 %v31
    %v72 = vunpack.c.l.b16 %v32
    %v73 = vunpack.c.l.b16 %v33
    %v74 = vunpack.c.l.b16 %v34
    %v75 = vunpack.c.l.b16 %v35
    %v76 = vunpack.c.l.b16 %v36
    %v77 = vunpack.c.l.b16 %v37
    %v78 = vunpack.c.l.b16 %v38
    %v79 = vpack.c.b16 %v64, %v63
    %v80 = vpack.c.b16 %v66, %v65
    %v81 = vpack.c.b16 %v68, %v67
    %v82 = vpack.c.b16 %v70, %v69
    %v83 = vpack.c.b16 %v72, %v71
    %v84 = vpack.c.b16 %v74, %v73
    %v85 = vpack.c.b16 %v76, %v75
    %v86 = vpack.c.b16 %v78, %v77
    %v91 = vunpack.c.l.b16 %v39
    %v92 = vunpack.c.l.b16 %v40
    %v93 = vunpack.c.l.b16 %v41
    %v94 = vunpack.c.l.b16 %v42
    %v95 = vpack.c.b16 %v92, %v91
    %v96 = vpack.c.b16 %v94, %v93
    %vm99 = vcmask 261120
    %v101 = vsel %vm99, %v79, 0
    %v104 = vsel %vm99, %v80, 0
    %v107 = vsel %vm99, %v81, 0
    %v110 = vsel %vm99, %v82, 0
    %v113 = vsel %vm99, %v83, 0
    %v116 = vsel %vm99, %v84, 0
    %v119 = vsel %vm99, %v85, 0
    %v122 = vsel %vm99, %v86, 0
    %124 = vmatpush.bf16.msra.mxu0 0
    %125 = vmatpush.bf16.msra.mxu0 0
    %126 = vmatpush.bf16.msra.mxu0 0
    %127 = vmatpush.bf16.msra.mxu0 0
    %128 = vmatpush.bf16.msra.mxu0 0
    %129 = vmatpush.bf16.msra.mxu0 0
    %130 = vmatpush.bf16.msra.mxu0 %v96
    %131 = vmatpush.bf16.msra.mxu0 %v95
    %132 = vmatmul.bf16.gmra.mxu0 %v101
    %v133 = vpop.f32.mrf.mxu0
    %v134 = vadd.f32 %v45, %v133
    %v135 = vpop.f32.mrf.mxu0
    %v136 = vadd.f32 %v45, %v135
    %137 = vmatmul.bf16.gmra.mxu0 %v104
    %v138 = vpop.f32.mrf.mxu0
    %v139 = vadd.f32 %v45, %v138
    %v140 = vpop.f32.mrf.mxu0
    %v141 = vadd.f32 %v45, %v140
    %142 = vmatmul.bf16.gmra.mxu0 %v107
    %v143 = vpop.f32.mrf.mxu0
    %v144 = vadd.f32 %v45, %v143
    %v145 = vpop.f32.mrf.mxu0
    %v146 = vadd.f32 %v45, %v145
    %147 = vmatmul.bf16.gmra.mxu0 %v110
    %v148 = vpop.f32.mrf.mxu0
    %v149 = vadd.f32 %v45, %v148
    %v150 = vpop.f32.mrf.mxu0
    %v151 = vadd.f32 %v45, %v150
    %152 = vmatmul.bf16.gmra.mxu0 %v113
    %v153 = vpop.f32.mrf.mxu0
    %v154 = vadd.f32 %v45, %v153
    %v155 = vpop.f32.mrf.mxu0
    %v156 = vadd.f32 %v45, %v155
    %157 = vmatmul.bf16.gmra.mxu0 %v116
    %v158 = vpop.f32.mrf.mxu0
    %v159 = vadd.f32 %v45, %v158
    %v160 = vpop.f32.mrf.mxu0
    %v161 = vadd.f32 %v45, %v160
    %162 = vmatmul.bf16.gmra.mxu0 %v119
    %v163 = vpop.f32.mrf.mxu0
    %v164 = vadd.f32 %v45, %v163
    %v165 = vpop.f32.mrf.mxu0
    %v166 = vadd.f32 %v45, %v165
    %167 = vmatmul.bf16.gmra.mxu0 %v122
    %v168 = vpop.f32.mrf.mxu0
    %v169 = vadd.f32 %v45, %v168
    %v170 = vpop.f32.mrf.mxu0
    %v171 = vadd.f32 %v45, %v170
    %172 = vdwg.mxu0
    %v173 = vmax.f32 %v134, 0.0
    %v174 = vmax.f32 %v136, 0.0
    %v175 = vmax.f32 %v139, 0.0
    %v176 = vmax.f32 %v141, 0.0
    %v177 = vmax.f32 %v144, 0.0
    %v178 = vmax.f32 %v146, 0.0
    %v179 = vmax.f32 %v149, 0.0
    %v180 = vmax.f32 %v151, 0.0
    %v181 = vmax.f32 %v154, 0.0
    %v182 = vmax.f32 %v156, 0.0
    %v183 = vmax.f32 %v159, 0.0
    %v184 = vmax.f32 %v161, 0.0
    %v185 = vmax.f32 %v164, 0.0
    %v186 = vmax.f32 %v166, 0.0
    %v187 = vmax.f32 %v169, 0.0
    %v188 = vmax.f32 %v171, 0.0
    %v189 = vsel %vm99, %v173, 0.0
    %190 = vadd.xlane.f32.xlu0 %v189
    %v191 = vpop.xlane.xlu0 %190
    %v192 = vsel %vm99, %v174, 0.0
    %193 = vadd.xlane.f32.xlu0 %v192
    %v194 = vpop.xlane.xlu0 %193
    %v195 = vsel %vm99, %v175, 0.0
    %196 = vadd.xlane.f32.xlu0 %v195
    %v197 = vpop.xlane.xlu0 %196
    %v198 = vsel %vm99, %v176, 0.0
    %199 = vadd.xlane.f32.xlu0 %v198
    %v200 = vpop.xlane.xlu0 %199
    %v201 = vsel %vm99, %v177, 0.0
    %202 = vadd.xlane.f32.xlu0 %v201
    %v203 = vpop.xlane.xlu0 %202
    %v204 = vsel %vm99, %v178, 0.0
    %205 = vadd.xlane.f32.xlu0 %v204
    %v206 = vpop.xlane.xlu0 %205
    %v207 = vsel %vm99, %v179, 0.0
    %208 = vadd.xlane.f32.xlu0 %v207
    %v209 = vpop.xlane.xlu0 %208
    %v210 = vsel %vm99, %v180, 0.0
    %211 = vadd.xlane.f32.xlu0 %v210
    %v212 = vpop.xlane.xlu0 %211
    %v213 = vsel %vm99, %v181, 0.0
    %214 = vadd.xlane.f32.xlu0 %v213
    %v215 = vpop.xlane.xlu0 %214
    %v216 = vsel %vm99, %v182, 0.0
    %217 = vadd.xlane.f32.xlu0 %v216
    %v218 = vpop.xlane.xlu0 %217
    %v219 = vsel %vm99, %v183, 0.0
    %220 = vadd.xlane.f32.xlu0 %v219
    %v221 = vpop.xlane.xlu0 %220
    %v222 = vsel %vm99, %v184, 0.0
    %223 = vadd.xlane.f32.xlu0 %v222
    %v224 = vpop.xlane.xlu0 %223
    %v225 = vsel %vm99, %v185, 0.0
    %226 = vadd.xlane.f32.xlu0 %v225
    %v227 = vpop.xlane.xlu0 %226
    %v228 = vsel %vm99, %v186, 0.0
    %229 = vadd.xlane.f32.xlu0 %v228
    %v230 = vpop.xlane.xlu0 %229
    %v231 = vsel %vm99, %v187, 0.0
    %232 = vadd.xlane.f32.xlu0 %v231
    %v233 = vpop.xlane.xlu0 %232
    %v234 = vsel %vm99, %v188, 0.0
    %235 = vadd.xlane.f32.xlu0 %v234
    %v236 = vpop.xlane.xlu0 %235
    %v237 = vrcp.pop 32.0
    %v238 = vmul.f32 32.0, %v237
    %v239 = vsub.f32 1.0, %v238
    %v240 = vmul.f32 %v237, %v239
    %v241 = vadd.f32 %v237, %v240
    %vm242 = vweird.f32 %v237
    %v243 = vsel %vm242, %v237, %v241
    %v244 = vmul.f32 %v191, %v243
    %v245 = vmul.f32 %v194, %v243
    %v246 = vmul.f32 %v197, %v243
    %v247 = vmul.f32 %v200, %v243
    %v248 = vmul.f32 %v203, %v243
    %v249 = vmul.f32 %v206, %v243
    %v250 = vmul.f32 %v209, %v243
    %v251 = vmul.f32 %v212, %v243
    %v252 = vmul.f32 %v215, %v243
    %v253 = vmul.f32 %v218, %v243
    %v254 = vmul.f32 %v221, %v243
    %v255 = vmul.f32 %v224, %v243
    %v256 = vmul.f32 %v227, %v243
    %v257 = vmul.f32 %v230, %v243
    %v258 = vmul.f32 %v233, %v243
    %v259 = vmul.f32 %v236, %v243
    %v260 = vsub.f32 %v173, %v244
    %v261 = vsub.f32 %v174, %v245
    %v262 = vsub.f32 %v175, %v246
    %v263 = vsub.f32 %v176, %v247
    %v264 = vsub.f32 %v177, %v248
    %v265 = vsub.f32 %v178, %v249
    %v266 = vsub.f32 %v179, %v250
    %v267 = vsub.f32 %v180, %v251
    %v268 = vsub.f32 %v181, %v252
    %v269 = vsub.f32 %v182, %v253
    %v270 = vsub.f32 %v183, %v254
    %v271 = vsub.f32 %v184, %v255
    %v272 = vsub.f32 %v185, %v256
    %v273 = vsub.f32 %v186, %v257
    %v274 = vsub.f32 %v187, %v258
    %v275 = vsub.f32 %v188, %v259
    %v276 = vmul.f32 %v260, %v260
    %v277 = vmul.f32 %v261, %v261
    %v278 = vmul.f32 %v262, %v262
    %v279 = vmul.f32 %v263, %v263
    %v280 = vmul.f32 %v264, %v264
    %v281 = vmul.f32 %v265, %v265
    %v282 = vmul.f32 %v266, %v266
    %v283 = vmul.f32 %v267, %v267
    %v284 = vmul.f32 %v268, %v268
    %v285 = vmul.f32 %v269, %v269
    %v286 = vmul.f32 %v270, %v270
    %v287 = vmul.f32 %v271, %v271
    %v288 = vmul.f32 %v272, %v272
    %v289 = vmul.f32 %v273, %v273
    %v290 = vmul.f32 %v274, %v274
    %v291 = vmul.f32 %v275, %v275
    %v292 = vsel %vm99, %v276, 0.0
    %293 = vadd.xlane.f32.xlu0 %v292
    %v294 = vpop.xlane.xlu0 %293
    %v295 = vsel %vm99, %v277, 0.0
    %296 = vadd.xlane.f32.xlu0 %v295
    %v297 = vpop.xlane.xlu0 %296
    %v298 = vsel %vm99, %v278, 0.0
    %299 = vadd.xlane.f32.xlu0 %v298
    %v300 = vpop.xlane.xlu0 %299
    %v301 = vsel %vm99, %v279, 0.0
    %302 = vadd.xlane.f32.xlu0 %v301
    %v303 = vpop.xlane.xlu0 %302
    %v304 = vsel %vm99, %v280, 0.0
    %305 = vadd.xlane.f32.xlu0 %v304
    %v306 = vpop.xlane.xlu0 %305
    %v307 = vsel %vm99, %v281, 0.0
    %308 = vadd.xlane.f32.xlu0 %v307
    %v309 = vpop.xlane.xlu0 %308
    %v310 = vsel %vm99, %v282, 0.0
    %311 = vadd.xlane.f32.xlu0 %v310
    %v312 = vpop.xlane.xlu0 %311
    %v313 = vsel %vm99, %v283, 0.0
    %314 = vadd.xlane.f32.xlu0 %v313
    %v315 = vpop.xlane.xlu0 %314
    %v316 = vsel %vm99, %v284, 0.0
    %317 = vadd.xlane.f32.xlu0 %v316
    %v318 = vpop.xlane.xlu0 %317
    %v319 = vsel %vm99, %v285, 0.0
    %320 = vadd.xlane.f32.xlu0 %v319
    %v321 = vpop.xlane.xlu0 %320
    %v322 = vsel %vm99, %v286, 0.0
    %323 = vadd.xlane.f32.xlu0 %v322
    %v324 = vpop.xlane.xlu0 %323
    %v325 = vsel %vm99, %v287, 0.0
    %326 = vadd.xlane.f32.xlu0 %v325
    %v327 = vpop.xlane.xlu0 %326
    %v328 = vsel %vm99, %v288, 0.0
    %329 = vadd.xlane.f32.xlu0 %v328
    %v330 = vpop.xlane.xlu0 %329
    %v331 = vsel %vm99, %v289, 0.0
    %332 = vadd.xlane.f32.xlu0 %v331
    %v333 = vpop.xlane.xlu0 %332
    %v334 = vsel %vm99, %v290, 0.0
    %335 = vadd.xlane.f32.xlu0 %v334
    %v336 = vpop.xlane.xlu0 %335
    %v337 = vsel %vm99, %v291, 0.0
    %338 = vadd.xlane.f32.xlu0 %v337
    %v339 = vpop.xlane.xlu0 %338
    %v340 = vmul.f32 %v294, %v243
    %v341 = vmul.f32 %v297, %v243
    %v342 = vmul.f32 %v300, %v243
    %v343 = vmul.f32 %v303, %v243
    %v344 = vmul.f32 %v306, %v243
    %v345 = vmul.f32 %v309, %v243
    %v346 = vmul.f32 %v312, %v243
    %v347 = vmul.f32 %v315, %v243
    %v348 = vmul.f32 %v318, %v243
    %v349 = vmul.f32 %v321, %v243
    %v350 = vmul.f32 %v324, %v243
    %v351 = vmul.f32 %v327, %v243
    %v352 = vmul.f32 %v330, %v243
    %v353 = vmul.f32 %v333, %v243
    %v354 = vmul.f32 %v336, %v243
    %v355 = vmul.f32 %v339, %v243
    %v356 = vadd.f32 %v340, 1e-05
    %v357 = vadd.f32 %v341, 1e-05
    %v358 = vadd.f32 %v342, 1e-05
    %v359 = vadd.f32 %v343, 1e-05
    %v360 = vadd.f32 %v344, 1e-05
    %v361 = vadd.f32 %v345, 1e-05
    %v362 = vadd.f32 %v346, 1e-05
    %v363 = vadd.f32 %v347, 1e-05
    %v364 = vadd.f32 %v348, 1e-05
    %v365 = vadd.f32 %v349, 1e-05
    %v366 = vadd.f32 %v350, 1e-05
    %v367 = vadd.f32 %v351, 1e-05
    %v368 = vadd.f32 %v352, 1e-05
    %v369 = vadd.f32 %v353, 1e-05
    %v370 = vadd.f32 %v354, 1e-05
    %v371 = vadd.f32 %v355, 1e-05
    %v372 = vrsqrt.pop %v356
    %v373 = vmul.f32 %v372, %v356
    %v374 = vmul.f32 %v373, %v372
    %v375 = vmul.f32 0.5, %v374
    %v376 = vsub.f32 1.5, %v375
    %v377 = vmul.f32 %v372, %v376
    %vm378 = vweird.f32 %v356
    %vm379 = vweird.f32 %v372
    %vm380 = vmor %vm378, %vm379
    %v381 = vsel %vm380, %v372, %v377
    %v382 = vrsqrt.pop %v357
    %v383 = vmul.f32 %v382, %v357
    %v384 = vmul.f32 %v383, %v382
    %v385 = vmul.f32 0.5, %v384
    %v386 = vsub.f32 1.5, %v385
    %v387 = vmul.f32 %v382, %v386
    %vm388 = vweird.f32 %v357
    %vm389 = vweird.f32 %v382
    %vm390 = vmor %vm388, %vm389
    %v391 = vsel %vm390, %v382, %v387
    %v392 = vrsqrt.pop %v358
    %v393 = vmul.f32 %v392, %v358
    %v394 = vmul.f32 %v393, %v392
    %v395 = vmul.f32 0.5, %v394
    %v396 = vsub.f32 1.5, %v395
    %v397 = vmul.f32 %v392, %v396
    %vm398 = vweird.f32 %v358
    %vm399 = vweird.f32 %v392
    %vm400 = vmor %vm398, %vm399
    %v401 = vsel %vm400, %v392, %v397
    %v402 = vrsqrt.pop %v359
    %v403 = vmul.f32 %v402, %v359
    %v404 = vmul.f32 %v403, %v402
    %v405 = vmul.f32 0.5, %v404
    %v406 = vsub.f32 1.5, %v405
    %v407 = vmul.f32 %v402, %v406
    %vm408 = vweird.f32 %v359
    %vm409 = vweird.f32 %v402
    %vm410 = vmor %vm408, %vm409
    %v411 = vsel %vm410, %v402, %v407
    %v412 = vrsqrt.pop %v360
    %v413 = vmul.f32 %v412, %v360
    %v414 = vmul.f32 %v413, %v412
    %v415 = vmul.f32 0.5, %v414
    %v416 = vsub.f32 1.5, %v415
    %v417 = vmul.f32 %v412, %v416
    %vm418 = vweird.f32 %v360
    %vm419 = vweird.f32 %v412
    %vm420 = vmor %vm418, %vm419
    %v421 = vsel %vm420, %v412, %v417
    %v422 = vrsqrt.pop %v361
    %v423 = vmul.f32 %v422, %v361
    %v424 = vmul.f32 %v423, %v422
    %v425 = vmul.f32 0.5, %v424
    %v426 = vsub.f32 1.5, %v425
    %v427 = vmul.f32 %v422, %v426
    %vm428 = vweird.f32 %v361
    %vm429 = vweird.f32 %v422
    %vm430 = vmor %vm428, %vm429
    %v431 = vsel %vm430, %v422, %v427
    %v432 = vrsqrt.pop %v362
    %v433 = vmul.f32 %v432, %v362
    %v434 = vmul.f32 %v433, %v432
    %v435 = vmul.f32 0.5, %v434
    %v436 = vsub.f32 1.5, %v435
    %v437 = vmul.f32 %v432, %v436
    %vm438 = vweird.f32 %v362
    %vm439 = vweird.f32 %v432
    %vm440 = vmor %vm438, %vm439
    %v441 = vsel %vm440, %v432, %v437
    %v442 = vrsqrt.pop %v363
    %v443 = vmul.f32 %v442, %v363
    %v444 = vmul.f32 %v443, %v442
    %v445 = vmul.f32 0.5, %v444
    %v446 = vsub.f32 1.5, %v445
    %v447 = vmul.f32 %v442, %v446
    %vm448 = vweird.f32 %v363
    %vm449 = vweird.f32 %v442
    %vm450 = vmor %vm448, %vm449
    %v451 = vsel %vm450, %v442, %v447
    %v452 = vrsqrt.pop %v364
    %v453 = vmul.f32 %v452, %v364
    %v454 = vmul.f32 %v453, %v452
    %v455 = vmul.f32 0.5, %v454
    %v456 = vsub.f32 1.5, %v455
    %v457 = vmul.f32 %v452, %v456
    %vm458 = vweird.f32 %v364
    %vm459 = vweird.f32 %v452
    %vm460 = vmor %vm458, %vm459
    %v461 = vsel %vm460, %v452, %v457
    %v462 = vrsqrt.pop %v365
    %v463 = vmul.f32 %v462, %v365
    %v464 = vmul.f32 %v463, %v462
    %v465 = vmul.f32 0.5, %v464
    %v466 = vsub.f32 1.5, %v465
    %v467 = vmul.f32 %v462, %v466
    %vm468 = vweird.f32 %v365
    %vm469 = vweird.f32 %v462
    %vm470 = vmor %vm468, %vm469
    %v471 = vsel %vm470, %v462, %v467
    %v472 = vrsqrt.pop %v366
    %v473 = vmul.f32 %v472, %v366
    %v474 = vmul.f32 %v473, %v472
    %v475 = vmul.f32 0.5, %v474
    %v476 = vsub.f32 1.5, %v475
    %v477 = vmul.f32 %v472, %v476
    %vm478 = vweird.f32 %v366
    %vm479 = vweird.f32 %v472
    %vm480 = vmor %vm478, %vm479
    %v481 = vsel %vm480, %v472, %v477
    %v482 = vrsqrt.pop %v367
    %v483 = vmul.f32 %v482, %v367
    %v484 = vmul.f32 %v483, %v482
    %v485 = vmul.f32 0.5, %v484
    %v486 = vsub.f32 1.5, %v485
    %v487 = vmul.f32 %v482, %v486
    %vm488 = vweird.f32 %v367
    %vm489 = vweird.f32 %v482
    %vm490 = vmor %vm488, %vm489
    %v491 = vsel %vm490, %v482, %v487
    %v492 = vrsqrt.pop %v368
    %v493 = vmul.f32 %v492, %v368
    %v494 = vmul.f32 %v493, %v492
    %v495 = vmul.f32 0.5, %v494
    %v496 = vsub.f32 1.5, %v495
    %v497 = vmul.f32 %v492, %v496
    %vm498 = vweird.f32 %v368
    %vm499 = vweird.f32 %v492
    %vm500 = vmor %vm498, %vm499
    %v501 = vsel %vm500, %v492, %v497
    %v502 = vrsqrt.pop %v369
    %v503 = vmul.f32 %v502, %v369
    %v504 = vmul.f32 %v503, %v502
    %v505 = vmul.f32 0.5, %v504
    %v506 = vsub.f32 1.5, %v505
    %v507 = vmul.f32 %v502, %v506
    %vm508 = vweird.f32 %v369
    %vm509 = vweird.f32 %v502
    %vm510 = vmor %vm508, %vm509
    %v511 = vsel %vm510, %v502, %v507
    %v512 = vrsqrt.pop %v370
    %v513 = vmul.f32 %v512, %v370
    %v514 = vmul.f32 %v513, %v512
    %v515 = vmul.f32 0.5, %v514
    %v516 = vsub.f32 1.5, %v515
    %v517 = vmul.f32 %v512, %v516
    %vm518 = vweird.f32 %v370
    %vm519 = vweird.f32 %v512
    %vm520 = vmor %vm518, %vm519
    %v521 = vsel %vm520, %v512, %v517
    %v522 = vrsqrt.pop %v371
    %v523 = vmul.f32 %v522, %v371
    %v524 = vmul.f32 %v523, %v522
    %v525 = vmul.f32 0.5, %v524
    %v526 = vsub.f32 1.5, %v525
    %v527 = vmul.f32 %v522, %v526
    %vm528 = vweird.f32 %v371
    %vm529 = vweird.f32 %v522
    %vm530 = vmor %vm528, %vm529
    %v531 = vsel %vm530, %v522, %v527
    %v532 = vld [vmem:[%s3] sm:$0x1]
    %v534 = vperm.slane %v532, 0
    %v536 = vmul.f32 %v260, %v534
    %v537 = vmul.f32 %v261, %v534
    %v538 = vmul.f32 %v262, %v534
    %v539 = vmul.f32 %v263, %v534
    %v540 = vmul.f32 %v264, %v534
    %v541 = vmul.f32 %v265, %v534
    %v542 = vmul.f32 %v266, %v534
    %v543 = vmul.f32 %v267, %v534
    %v544 = vmul.f32 %v268, %v534
    %v545 = vmul.f32 %v269, %v534
    %v546 = vmul.f32 %v270, %v534
    %v547 = vmul.f32 %v271, %v534
    %v548 = vmul.f32 %v272, %v534
    %v549 = vmul.f32 %v273, %v534
    %v550 = vmul.f32 %v274, %v534
    %v551 = vmul.f32 %v275, %v534
    %v552 = vsel %vm99, %v536, 0.0
    %553 = vadd.xlane.f32.xlu0 %v552
    %v554 = vpop.xlane.xlu0 %553
    %v555 = vsel %vm99, %v537, 0.0
    %556 = vadd.xlane.f32.xlu0 %v555
    %v557 = vpop.xlane.xlu0 %556
    %v558 = vsel %vm99, %v538, 0.0
    %559 = vadd.xlane.f32.xlu0 %v558
    %v560 = vpop.xlane.xlu0 %559
    %v561 = vsel %vm99, %v539, 0.0
    %562 = vadd.xlane.f32.xlu0 %v561
    %v563 = vpop.xlane.xlu0 %562
    %v564 = vsel %vm99, %v540, 0.0
    %565 = vadd.xlane.f32.xlu0 %v564
    %v566 = vpop.xlane.xlu0 %565
    %v567 = vsel %vm99, %v541, 0.0
    %568 = vadd.xlane.f32.xlu0 %v567
    %v569 = vpop.xlane.xlu0 %568
    %v570 = vsel %vm99, %v542, 0.0
    %571 = vadd.xlane.f32.xlu0 %v570
    %v572 = vpop.xlane.xlu0 %571
    %v573 = vsel %vm99, %v543, 0.0
    %574 = vadd.xlane.f32.xlu0 %v573
    %v575 = vpop.xlane.xlu0 %574
    %v576 = vsel %vm99, %v544, 0.0
    %577 = vadd.xlane.f32.xlu0 %v576
    %v578 = vpop.xlane.xlu0 %577
    %v579 = vsel %vm99, %v545, 0.0
    %580 = vadd.xlane.f32.xlu0 %v579
    %v581 = vpop.xlane.xlu0 %580
    %v582 = vsel %vm99, %v546, 0.0
    %583 = vadd.xlane.f32.xlu0 %v582
    %v584 = vpop.xlane.xlu0 %583
    %v585 = vsel %vm99, %v547, 0.0
    %586 = vadd.xlane.f32.xlu0 %v585
    %v587 = vpop.xlane.xlu0 %586
    %v588 = vsel %vm99, %v548, 0.0
    %589 = vadd.xlane.f32.xlu0 %v588
    %v590 = vpop.xlane.xlu0 %589
    %v591 = vsel %vm99, %v549, 0.0
    %592 = vadd.xlane.f32.xlu0 %v591
    %v593 = vpop.xlane.xlu0 %592
    %v594 = vsel %vm99, %v550, 0.0
    %595 = vadd.xlane.f32.xlu0 %v594
    %v596 = vpop.xlane.xlu0 %595
    %v597 = vsel %vm99, %v551, 0.0
    %598 = vadd.xlane.f32.xlu0 %v597
    %v599 = vpop.xlane.xlu0 %598
    %v600 = vmul.f32 %v381, %v554
    %v601 = vmul.f32 %v391, %v557
    %v602 = vmul.f32 %v401, %v560
    %v603 = vmul.f32 %v411, %v563
    %v604 = vmul.f32 %v421, %v566
    %v605 = vmul.f32 %v431, %v569
    %v606 = vmul.f32 %v441, %v572
    %v607 = vmul.f32 %v451, %v575
    %v608 = vmul.f32 %v461, %v578
    %v609 = vmul.f32 %v471, %v581
    %v610 = vmul.f32 %v481, %v584
    %v611 = vmul.f32 %v491, %v587
    %v612 = vmul.f32 %v501, %v590
    %v613 = vmul.f32 %v511, %v593
    %v614 = vmul.f32 %v521, %v596
    %v615 = vmul.f32 %v531, %v599
    %s616 = sld [smem:[#allocation2]]
    %v617 = vstv %s616
    %v618 = vadd.f32 %v600, %v617
    %v619 = vadd.f32 %v601, %v617
    %v620 = vadd.f32 %v602, %v617
    %v621 = vadd.f32 %v603, %v617
    %v622 = vadd.f32 %v604, %v617
    %v623 = vadd.f32 %v605, %v617
    %v624 = vadd.f32 %v606, %v617
    %v625 = vadd.f32 %v607, %v617
    %v626 = vadd.f32 %v608, %v617
    %v627 = vadd.f32 %v609, %v617
    %v628 = vadd.f32 %v610, %v617
    %v629 = vadd.f32 %v611, %v617
    %v630 = vadd.f32 %v612, %v617
    %v631 = vadd.f32 %v613, %v617
    %v632 = vadd.f32 %v614, %v617
    %v633 = vadd.f32 %v615, %v617
    %v650 = vlaneseq
    %v651 = vand.u32 %v650, 127
    %v652 = vperm.slane %v618, %v651
    %v653 = vadd.s32 %v651, 4294967288
    %v654 = vperm.slane %v619, %v653
    %vm655 = vcmask 130112
    %v656 = vsel %vm655, %v654, %v652
    %v657 = vadd.s32 %v651, 4294967280
    %v658 = vperm.slane %v620, %v657
    %vm659 = vcmask 195712
    %v660 = vsel %vm659, %v658, %v656
    %v661 = vadd.s32 %v651, 4294967272
    %v662 = vperm.slane %v621, %v661
    %vm663 = vcmask 261312
    %v664 = vsel %vm663, %v662, %v660
    %v665 = vadd.s32 %v651, 4294967264
    %v666 = vperm.slane %v622, %v665
    %vm667 = vcmask 326912
    %v668 = vsel %vm667, %v666, %v664
    %v669 = vadd.s32 %v651, 4294967256
    %v670 = vperm.slane %v623, %v669
    %vm671 = vcmask 392512
    %v672 = vsel %vm671, %v670, %v668
    %v673 = vadd.s32 %v651, 4294967248
    %v674 = vperm.slane %v624, %v673
    %vm675 = vcmask 458112
    %v676 = vsel %vm675, %v674, %v672
    %v677 = vadd.s32 %v651, 4294967240
    %v678 = vperm.slane %v625, %v677
    %vm679 = vcmask 523712
    %v680 = vsel %vm679, %v678, %v676
    %v681 = vadd.s32 %v651, 4294967232
    %v682 = vperm.slane %v626, %v681
    %vm683 = vcmask 589312
    %v684 = vsel %vm683, %v682, %v680
    %v685 = vadd.s32 %v651, 4294967224
    %v686 = vperm.slane %v627, %v685
    %vm687 = vcmask 654912
    %v688 = vsel %vm687, %v686, %v684
    %v689 = vadd.s32 %v651, 4294967216
    %v690 = vperm.slane %v628, %v689
    %vm691 = vcmask 720512
    %v692 = vsel %vm691, %v690, %v688
    %v693 = vadd.s32 %v651, 4294967208
    %v694 = vperm.slane %v629, %v693
    %vm695 = vcmask 786112
    %v696 = vsel %vm695, %v694, %v692
    %v697 = vadd.s32 %v651, 4294967200
    %v698 = vperm.slane %v630, %v697
    %vm699 = vcmask 851712
    %v700 = vsel %vm699, %v698, %v696
    %v701 = vadd.s32 %v651, 4294967192
    %v702 = vperm.slane %v631, %v701
    %vm703 = vcmask 917312
    %v704 = vsel %vm703, %v702, %v700
    %v705 = vadd.s32 %v651, 4294967184
    %v706 = vperm.slane %v632, %v705
    %vm707 = vcmask 982912
    %v708 = vsel %vm707, %v706, %v704
    %v709 = vadd.s32 %v651, 4294967176
    %v710 = vperm.slane %v633, %v709
    %vm711 = vcmask 1048512
    %v712 = vsel %vm711, %v710, %v708
    %714 = vst [vmem:[#allocation3] sm:$0x1] %v712
    // Predicated region
    $region22: #{tpu_custom_call.1} parent=1 // pred_check
      _
    $region23: #{tpu_custom_call.1} parent=1 // pred_check_branch
      %716 = sbr.rel (0) target = $region25
    $region24: #{tpu_custom_call.1} parent=1 // pred_region
      %718 = vsyncadd [#allocation4], 0
      %s720 = sshll.u32 [#allocation3], 4
      %s721 = int_to_ptr.vmem [resolvable:$true] %s720
      %s722 = sshll.u32 %s5, 4
      %s723 = int_to_ptr.hbm [resolvable:$true] %s722
      %725 = dma.vmem_to_hbm [thread:$0]  %s721, 16, %s723, [#allocation4]
    $region25: #{tpu_custom_call.1} parent=1 // pred_fallthru
      _
    // Predicated region
    $region26: #{tpu_custom_call.1} parent=1 // pred_check
      _
    $region27: #{tpu_custom_call.1} parent=1 // pred_check_branch
      %727 = sbr.rel (0) target = $region29
    $region28: #{tpu_custom_call.1} parent=1 // pred_region
      %729 = dma.done [#allocation4], 16
    $region29: #{tpu_custom_call.1} parent=1 // pred_fallthru
      _
    %730 = vsyncpa [#allocation4], 1

// kernel: tpu_custom_call.1
$region0: #{tpu_custom_call.1}
  #allocation0 [shape = 'u32[]', space=smem, size = 0x4, offset = 0x4, fixed_abs, tag = 'smem constant byte address 0x4 - core index']
  #allocation1 [shape = 'u32[72,128]{1,0:T(1,128)}', space=vmem, size = 0x9000, scoped, tag = 'internal scratch']
  #allocation2 [shape = 'f32[1,1]{1,0:T(1,128)S(6)}', space=smem, size = 0x200, scoped, tag = 'scoped memory for tpu_custom_call.1']
  %s0 = inlined_call_operand.vmem [shape: bf16[128,32], index: 0, kind: input, shape index: {}]
  %s1 = inlined_call_operand.vmem [shape: bf16[32,32], index: 1, kind: input, shape index: {}]
  %s2 = inlined_call_operand.vmem [shape: f32[1,32], index: 2, kind: input, shape index: {}]
  %s3 = inlined_call_operand.vmem [shape: f32[1,32], index: 3, kind: input, shape index: {}]
  %s4 = inlined_call_operand.<no memory space> [shape: f32[1,1], index: 4, kind: input, shape index: {}]
  %s5 = inlined_call_operand.hbm [shape: f32[1,128], index: 5, kind: output, shape index: {}]
  %s6 = sld [smem:[#allocation0]]
  $region30: #{tpu_custom_call.1} parent=0
    _
  %s8 = ssub.s32 1, %s6
  %s9 = scalar_select 0, %s8, %s6
  %10 = sst [smem:[#allocation2]] %s4
  $region1: #{tpu_custom_call.1} parent=0
    #allocation3 [shape = 'u8[512]{0}', space=vmem, size = 0x400, scoped, tag = 'output window, operand 0, single buffered']
    #allocation4 [shape = 's32[1]{0}', space=sflag, size = 0x4, scoped, tag = 'scoped memory for tpu_custom_call.1']
    %11 = vsyncpa [#allocation4], 0
    // Predicated region
    $region2: #{tpu_custom_call.1} parent=1 // pred_check
      _
    $region3: #{tpu_custom_call.1} parent=1 // pred_check_branch
      %13 = sbr.rel (0) target = $region5
    $region4: #{tpu_custom_call.1} parent=1 // pred_region
      _
    $region5: #{tpu_custom_call.1} parent=1 // pred_fallthru
      _
    // Predicated region
    $region6: #{tpu_custom_call.1} parent=1 // pred_check
      _
    $region7: #{tpu_custom_call.1} parent=1 // pred_check_branch
      %15 = sbr.rel (0) target = $region9
    $region8: #{tpu_custom_call.1} parent=1 // pred_region
      _
    $region9: #{tpu_custom_call.1} parent=1 // pred_fallthru
      _
    // Predicated region
    $region10: #{tpu_custom_call.1} parent=1 // pred_check
      _
    $region11: #{tpu_custom_call.1} parent=1 // pred_check_branch
      %17 = sbr.rel (0) target = $region13
    $region12: #{tpu_custom_call.1} parent=1 // pred_region
      _
    $region13: #{tpu_custom_call.1} parent=1 // pred_fallthru
      _
    // Predicated region
    $region14: #{tpu_custom_call.1} parent=1 // pred_check
      _
    $region15: #{tpu_custom_call.1} parent=1 // pred_check_branch
      %19 = sbr.rel (0) target = $region17
    $region16: #{tpu_custom_call.1} parent=1 // pred_region
      _
    $region17: #{tpu_custom_call.1} parent=1 // pred_fallthru
      _
    // Predicated region
    $region18: #{tpu_custom_call.1} parent=1 // pred_check
      _
    $region19: #{tpu_custom_call.1} parent=1 // pred_check_branch
      %21 = sbr.rel (0) target = $region21
    $region20: #{tpu_custom_call.1} parent=1 // pred_region
      _
    $region21: #{tpu_custom_call.1} parent=1 // pred_fallthru
      _
    %v23 = vld [vmem:[%s0] sm:$0xf]
    %v24 = vld [vmem:[%s0 + $0x4] sm:$0xf]
    %v25 = vld [vmem:[%s0 + $0x8] sm:$0xf]
    %v26 = vld [vmem:[%s0 + $0xc] sm:$0xf]
    %v27 = vld [vmem:[%s0 + $0x10] sm:$0xf]
    %v28 = vld [vmem:[%s0 + $0x14] sm:$0xf]
    %v29 = vld [vmem:[%s0 + $0x18] sm:$0xf]
    %v30 = vld [vmem:[%s0 + $0x1c] sm:$0xf]
    %v31 = vld [vmem:[%s0 + $0x20] sm:$0xf]
    %v32 = vld [vmem:[%s0 + $0x24] sm:$0xf]
    %v33 = vld [vmem:[%s0 + $0x28] sm:$0xf]
    %v34 = vld [vmem:[%s0 + $0x2c] sm:$0xf]
    %v35 = vld [vmem:[%s0 + $0x30] sm:$0xf]
    %v36 = vld [vmem:[%s0 + $0x34] sm:$0xf]
    %v37 = vld [vmem:[%s0 + $0x38] sm:$0xf]
    %v38 = vld [vmem:[%s0 + $0x3c] sm:$0xf]
    %v39 = vld [vmem:[%s1] sm:$0xf]
    %v40 = vld [vmem:[%s1 + $0x4] sm:$0xf]
    %v41 = vld [vmem:[%s1 + $0x8] sm:$0xf]
    %v42 = vld [vmem:[%s1 + $0xc] sm:$0xf]
    %v43 = vld [vmem:[%s2] sm:$0x1]
    %v45 = vperm.slane %v43, 0
    %v63 = vunpack.c.l.b16 %v23
    %v64 = vunpack.c.l.b16 %v24
    %v65 = vunpack.c.l.b16 %v25
    %v66 = vunpack.c.l.b16 %v26
    %v67 = vunpack.c.l.b16 %v27
    %v68 = vunpack.c.l.b16 %v28
    %v69 = vunpack.c.l.b16 %v29
    %v70 = vunpack.c.l.b16 %v30
    %v71 = vunpack.c.l.b16 %v31
    %v72 = vunpack.c.l.b16 %v32
    %v73 = vunpack.c.l.b16 %v33
    %v74 = vunpack.c.l.b16 %v34
    %v75 = vunpack.c.l.b16 %v35
    %v76 = vunpack.c.l.b16 %v36
    %v77 = vunpack.c.l.b16 %v37
    %v78 = vunpack.c.l.b16 %v38
    %v79 = vpack.c.b16 %v64, %v63
    %v80 = vpack.c.b16 %v66, %v65
    %v81 = vpack.c.b16 %v68, %v67
    %v82 = vpack.c.b16 %v70, %v69
    %v83 = vpack.c.b16 %v72, %v71
    %v84 = vpack.c.b16 %v74, %v73
    %v85 = vpack.c.b16 %v76, %v75
    %v86 = vpack.c.b16 %v78, %v77
    %v91 = vunpack.c.l.b16 %v39
    %v92 = vunpack.c.l.b16 %v40
    %v93 = vunpack.c.l.b16 %v41
    %v94 = vunpack.c.l.b16 %v42
    %v95 = vpack.c.b16 %v92, %v91
    %v96 = vpack.c.b16 %v94, %v93
    %vm99 = vcmask 261120
    %v101 = vsel %vm99, %v79, 0
    %v104 = vsel %vm99, %v80, 0
    %v107 = vsel %vm99, %v81, 0
    %v110 = vsel %vm99, %v82, 0
    %v113 = vsel %vm99, %v83, 0
    %v116 = vsel %vm99, %v84, 0
    %v119 = vsel %vm99, %v85, 0
    %v122 = vsel %vm99, %v86, 0
    %124 = vmatpush.bf16.msra.mxu0 0
    %125 = vmatpush.bf16.msra.mxu0 0
    %126 = vmatpush.bf16.msra.mxu0 0
    %127 = vmatpush.bf16.msra.mxu0 0
    %128 = vmatpush.bf16.msra.mxu0 0
    %129 = vmatpush.bf16.msra.mxu0 0
    %130 = vmatpush.bf16.msra.mxu0 %v96
    %131 = vmatpush.bf16.msra.mxu0 %v95
    %132 = vmatmul.bf16.gmra.mxu0 %v101
    %v133 = vpop.f32.mrf.mxu0
    %v134 = vadd.f32 %v45, %v133
    %v135 = vpop.f32.mrf.mxu0
    %v136 = vadd.f32 %v45, %v135
    %137 = vmatmul.bf16.gmra.mxu0 %v104
    %v138 = vpop.f32.mrf.mxu0
    %v139 = vadd.f32 %v45, %v138
    %v140 = vpop.f32.mrf.mxu0
    %v141 = vadd.f32 %v45, %v140
    %142 = vmatmul.bf16.gmra.mxu0 %v107
    %v143 = vpop.f32.mrf.mxu0
    %v144 = vadd.f32 %v45, %v143
    %v145 = vpop.f32.mrf.mxu0
    %v146 = vadd.f32 %v45, %v145
    %147 = vmatmul.bf16.gmra.mxu0 %v110
    %v148 = vpop.f32.mrf.mxu0
    %v149 = vadd.f32 %v45, %v148
    %v150 = vpop.f32.mrf.mxu0
    %v151 = vadd.f32 %v45, %v150
    %152 = vmatmul.bf16.gmra.mxu0 %v113
    %v153 = vpop.f32.mrf.mxu0
    %v154 = vadd.f32 %v45, %v153
    %v155 = vpop.f32.mrf.mxu0
    %v156 = vadd.f32 %v45, %v155
    %157 = vmatmul.bf16.gmra.mxu0 %v116
    %v158 = vpop.f32.mrf.mxu0
    %v159 = vadd.f32 %v45, %v158
    %v160 = vpop.f32.mrf.mxu0
    %v161 = vadd.f32 %v45, %v160
    %162 = vmatmul.bf16.gmra.mxu0 %v119
    %v163 = vpop.f32.mrf.mxu0
    %v164 = vadd.f32 %v45, %v163
    %v165 = vpop.f32.mrf.mxu0
    %v166 = vadd.f32 %v45, %v165
    %167 = vmatmul.bf16.gmra.mxu0 %v122
    %v168 = vpop.f32.mrf.mxu0
    %v169 = vadd.f32 %v45, %v168
    %v170 = vpop.f32.mrf.mxu0
    %v171 = vadd.f32 %v45, %v170
    %172 = vdwg.mxu0
    %v173 = vmax.f32 %v134, 0.0
    %v174 = vmax.f32 %v136, 0.0
    %v175 = vmax.f32 %v139, 0.0
    %v176 = vmax.f32 %v141, 0.0
    %v177 = vmax.f32 %v144, 0.0
    %v178 = vmax.f32 %v146, 0.0
    %v179 = vmax.f32 %v149, 0.0
    %v180 = vmax.f32 %v151, 0.0
    %v181 = vmax.f32 %v154, 0.0
    %v182 = vmax.f32 %v156, 0.0
    %v183 = vmax.f32 %v159, 0.0
    %v184 = vmax.f32 %v161, 0.0
    %v185 = vmax.f32 %v164, 0.0
    %v186 = vmax.f32 %v166, 0.0
    %v187 = vmax.f32 %v169, 0.0
    %v188 = vmax.f32 %v171, 0.0
    %v189 = vsel %vm99, %v173, 0.0
    %190 = vadd.xlane.f32.xlu0 %v189
    %v191 = vpop.xlane.xlu0 %190
    %v192 = vsel %vm99, %v174, 0.0
    %193 = vadd.xlane.f32.xlu0 %v192
    %v194 = vpop.xlane.xlu0 %193
    %v195 = vsel %vm99, %v175, 0.0
    %196 = vadd.xlane.f32.xlu0 %v195
    %v197 = vpop.xlane.xlu0 %196
    %v198 = vsel %vm99, %v176, 0.0
    %199 = vadd.xlane.f32.xlu0 %v198
    %v200 = vpop.xlane.xlu0 %199
    %v201 = vsel %vm99, %v177, 0.0
    %202 = vadd.xlane.f32.xlu0 %v201
    %v203 = vpop.xlane.xlu0 %202
    %v204 = vsel %vm99, %v178, 0.0
    %205 = vadd.xlane.f32.xlu0 %v204
    %v206 = vpop.xlane.xlu0 %205
    %v207 = vsel %vm99, %v179, 0.0
    %208 = vadd.xlane.f32.xlu0 %v207
    %v209 = vpop.xlane.xlu0 %208
    %v210 = vsel %vm99, %v180, 0.0
    %211 = vadd.xlane.f32.xlu0 %v210
    %v212 = vpop.xlane.xlu0 %211
    %v213 = vsel %vm99, %v181, 0.0
    %214 = vadd.xlane.f32.xlu0 %v213
    %v215 = vpop.xlane.xlu0 %214
    %v216 = vsel %vm99, %v182, 0.0
    %217 = vadd.xlane.f32.xlu0 %v216
    %v218 = vpop.xlane.xlu0 %217
    %v219 = vsel %vm99, %v183, 0.0
    %220 = vadd.xlane.f32.xlu0 %v219
    %v221 = vpop.xlane.xlu0 %220
    %v222 = vsel %vm99, %v184, 0.0
    %223 = vadd.xlane.f32.xlu0 %v222
    %v224 = vpop.xlane.xlu0 %223
    %v225 = vsel %vm99, %v185, 0.0
    %226 = vadd.xlane.f32.xlu0 %v225
    %v227 = vpop.xlane.xlu0 %226
    %v228 = vsel %vm99, %v186, 0.0
    %229 = vadd.xlane.f32.xlu0 %v228
    %v230 = vpop.xlane.xlu0 %229
    %v231 = vsel %vm99, %v187, 0.0
    %232 = vadd.xlane.f32.xlu0 %v231
    %v233 = vpop.xlane.xlu0 %232
    %v234 = vsel %vm99, %v188, 0.0
    %235 = vadd.xlane.f32.xlu0 %v234
    %v236 = vpop.xlane.xlu0 %235
    %v237 = vrcp.pop 32.0
    %v238 = vmul.f32 32.0, %v237
    %v239 = vsub.f32 1.0, %v238
    %v240 = vmul.f32 %v237, %v239
    %v241 = vadd.f32 %v237, %v240
    %vm242 = vweird.f32 %v237
    %v243 = vsel %vm242, %v237, %v241
    %v244 = vmul.f32 %v191, %v243
    %v245 = vmul.f32 %v194, %v243
    %v246 = vmul.f32 %v197, %v243
    %v247 = vmul.f32 %v200, %v243
    %v248 = vmul.f32 %v203, %v243
    %v249 = vmul.f32 %v206, %v243
    %v250 = vmul.f32 %v209, %v243
    %v251 = vmul.f32 %v212, %v243
    %v252 = vmul.f32 %v215, %v243
    %v253 = vmul.f32 %v218, %v243
    %v254 = vmul.f32 %v221, %v243
    %v255 = vmul.f32 %v224, %v243
    %v256 = vmul.f32 %v227, %v243
    %v257 = vmul.f32 %v230, %v243
    %v258 = vmul.f32 %v233, %v243
    %v259 = vmul.f32 %v236, %v243
    %v260 = vsub.f32 %v173, %v244
    %v261 = vsub.f32 %v174, %v245
    %v262 = vsub.f32 %v175, %v246
    %v263 = vsub.f32 %v176, %v247
    %v264 = vsub.f32 %v177, %v248
    %v265 = vsub.f32 %v178, %v249
    %v266 = vsub.f32 %v179, %v250
    %v267 = vsub.f32 %v180, %v251
    %v268 = vsub.f32 %v181, %v252
    %v269 = vsub.f32 %v182, %v253
    %v270 = vsub.f32 %v183, %v254
    %v271 = vsub.f32 %v184, %v255
    %v272 = vsub.f32 %v185, %v256
    %v273 = vsub.f32 %v186, %v257
    %v274 = vsub.f32 %v187, %v258
    %v275 = vsub.f32 %v188, %v259
    %v276 = vmul.f32 %v260, %v260
    %v277 = vmul.f32 %v261, %v261
    %v278 = vmul.f32 %v262, %v262
    %v279 = vmul.f32 %v263, %v263
    %v280 = vmul.f32 %v264, %v264
    %v281 = vmul.f32 %v265, %v265
    %v282 = vmul.f32 %v266, %v266
    %v283 = vmul.f32 %v267, %v267
    %v284 = vmul.f32 %v268, %v268
    %v285 = vmul.f32 %v269, %v269
    %v286 = vmul.f32 %v270, %v270
    %v287 = vmul.f32 %v271, %v271
    %v288 = vmul.f32 %v272, %v272
    %v289 = vmul.f32 %v273, %v273
    %v290 = vmul.f32 %v274, %v274
    %v291 = vmul.f32 %v275, %v275
    %v292 = vsel %vm99, %v276, 0.0
    %293 = vadd.xlane.f32.xlu0 %v292
    %v294 = vpop.xlane.xlu0 %293
    %v295 = vsel %vm99, %v277, 0.0
    %296 = vadd.xlane.f32.xlu0 %v295
    %v297 = vpop.xlane.xlu0 %296
    %v298 = vsel %vm99, %v278, 0.0
    %299 = vadd.xlane.f32.xlu0 %v298
    %v300 = vpop.xlane.xlu0 %299
    %v301 = vsel %vm99, %v279, 0.0
    %302 = vadd.xlane.f32.xlu0 %v301
    %v303 = vpop.xlane.xlu0 %302
    %v304 = vsel %vm99, %v280, 0.0
    %305 = vadd.xlane.f32.xlu0 %v304
    %v306 = vpop.xlane.xlu0 %305
    %v307 = vsel %vm99, %v281, 0.0
    %308 = vadd.xlane.f32.xlu0 %v307
    %v309 = vpop.xlane.xlu0 %308
    %v310 = vsel %vm99, %v282, 0.0
    %311 = vadd.xlane.f32.xlu0 %v310
    %v312 = vpop.xlane.xlu0 %311
    %v313 = vsel %vm99, %v283, 0.0
    %314 = vadd.xlane.f32.xlu0 %v313
    %v315 = vpop.xlane.xlu0 %314
    %v316 = vsel %vm99, %v284, 0.0
    %317 = vadd.xlane.f32.xlu0 %v316
    %v318 = vpop.xlane.xlu0 %317
    %v319 = vsel %vm99, %v285, 0.0
    %320 = vadd.xlane.f32.xlu0 %v319
    %v321 = vpop.xlane.xlu0 %320
    %v322 = vsel %vm99, %v286, 0.0
    %323 = vadd.xlane.f32.xlu0 %v322
    %v324 = vpop.xlane.xlu0 %323
    %v325 = vsel %vm99, %v287, 0.0
    %326 = vadd.xlane.f32.xlu0 %v325
    %v327 = vpop.xlane.xlu0 %326
    %v328 = vsel %vm99, %v288, 0.0
    %329 = vadd.xlane.f32.xlu0 %v328
    %v330 = vpop.xlane.xlu0 %329
    %v331 = vsel %vm99, %v289, 0.0
    %332 = vadd.xlane.f32.xlu0 %v331
    %v333 = vpop.xlane.xlu0 %332
    %v334 = vsel %vm99, %v290, 0.0
    %335 = vadd.xlane.f32.xlu0 %v334
    %v336 = vpop.xlane.xlu0 %335
    %v337 = vsel %vm99, %v291, 0.0
    %338 = vadd.xlane.f32.xlu0 %v337
    %v339 = vpop.xlane.xlu0 %338
    %v340 = vmul.f32 %v294, %v243
    %v341 = vmul.f32 %v297, %v243
    %v342 = vmul.f32 %v300, %v243
    %v343 = vmul.f32 %v303, %v243
    %v344 = vmul.f32 %v306, %v243
    %v345 = vmul.f32 %v309, %v243
    %v346 = vmul.f32 %v312, %v243
    %v347 = vmul.f32 %v315, %v243
    %v348 = vmul.f32 %v318, %v243
    %v349 = vmul.f32 %v321, %v243
    %v350 = vmul.f32 %v324, %v243
    %v351 = vmul.f32 %v327, %v243
    %v352 = vmul.f32 %v330, %v243
    %v353 = vmul.f32 %v333, %v243
    %v354 = vmul.f32 %v336, %v243
    %v355 = vmul.f32 %v339, %v243
    %v356 = vadd.f32 %v340, 1e-05
    %v357 = vadd.f32 %v341, 1e-05
    %v358 = vadd.f32 %v342, 1e-05
    %v359 = vadd.f32 %v343, 1e-05
    %v360 = vadd.f32 %v344, 1e-05
    %v361 = vadd.f32 %v345, 1e-05
    %v362 = vadd.f32 %v346, 1e-05
    %v363 = vadd.f32 %v347, 1e-05
    %v364 = vadd.f32 %v348, 1e-05
    %v365 = vadd.f32 %v349, 1e-05
    %v366 = vadd.f32 %v350, 1e-05
    %v367 = vadd.f32 %v351, 1e-05
    %v368 = vadd.f32 %v352, 1e-05
    %v369 = vadd.f32 %v353, 1e-05
    %v370 = vadd.f32 %v354, 1e-05
    %v371 = vadd.f32 %v355, 1e-05
    %v372 = vrsqrt.pop %v356
    %v373 = vmul.f32 %v372, %v356
    %v374 = vmul.f32 %v373, %v372
    %v375 = vmul.f32 0.5, %v374
    %v376 = vsub.f32 1.5, %v375
    %v377 = vmul.f32 %v372, %v376
    %vm378 = vweird.f32 %v356
    %vm379 = vweird.f32 %v372
    %vm380 = vmor %vm378, %vm379
    %v381 = vsel %vm380, %v372, %v377
    %v382 = vrsqrt.pop %v357
    %v383 = vmul.f32 %v382, %v357
    %v384 = vmul.f32 %v383, %v382
    %v385 = vmul.f32 0.5, %v384
    %v386 = vsub.f32 1.5, %v385
    %v387 = vmul.f32 %v382, %v386
    %vm388 = vweird.f32 %v357
    %vm389 = vweird.f32 %v382
    %vm390 = vmor %vm388, %vm389
    %v391 = vsel %vm390, %v382, %v387
    %v392 = vrsqrt.pop %v358
    %v393 = vmul.f32 %v392, %v358
    %v394 = vmul.f32 %v393, %v392
    %v395 = vmul.f32 0.5, %v394
    %v396 = vsub.f32 1.5, %v395
    %v397 = vmul.f32 %v392, %v396
    %vm398 = vweird.f32 %v358
    %vm399 = vweird.f32 %v392
    %vm400 = vmor %vm398, %vm399
    %v401 = vsel %vm400, %v392, %v397
    %v402 = vrsqrt.pop %v359
    %v403 = vmul.f32 %v402, %v359
    %v404 = vmul.f32 %v403, %v402
    %v405 = vmul.f32 0.5, %v404
    %v406 = vsub.f32 1.5, %v405
    %v407 = vmul.f32 %v402, %v406
    %vm408 = vweird.f32 %v359
    %vm409 = vweird.f32 %v402
    %vm410 = vmor %vm408, %vm409
    %v411 = vsel %vm410, %v402, %v407
    %v412 = vrsqrt.pop %v360
    %v413 = vmul.f32 %v412, %v360
    %v414 = vmul.f32 %v413, %v412
    %v415 = vmul.f32 0.5, %v414
    %v416 = vsub.f32 1.5, %v415
    %v417 = vmul.f32 %v412, %v416
    %vm418 = vweird.f32 %v360
    %vm419 = vweird.f32 %v412
    %vm420 = vmor %vm418, %vm419
    %v421 = vsel %vm420, %v412, %v417
    %v422 = vrsqrt.pop %v361
    %v423 = vmul.f32 %v422, %v361
    %v424 = vmul.f32 %v423, %v422
    %v425 = vmul.f32 0.5, %v424
    %v426 = vsub.f32 1.5, %v425
    %v427 = vmul.f32 %v422, %v426
    %vm428 = vweird.f32 %v361
    %vm429 = vweird.f32 %v422
    %vm430 = vmor %vm428, %vm429
    %v431 = vsel %vm430, %v422, %v427
    %v432 = vrsqrt.pop %v362
    %v433 = vmul.f32 %v432, %v362
    %v434 = vmul.f32 %v433, %v432
    %v435 = vmul.f32 0.5, %v434
    %v436 = vsub.f32 1.5, %v435
    %v437 = vmul.f32 %v432, %v436
    %vm438 = vweird.f32 %v362
    %vm439 = vweird.f32 %v432
    %vm440 = vmor %vm438, %vm439
    %v441 = vsel %vm440, %v432, %v437
    %v442 = vrsqrt.pop %v363
    %v443 = vmul.f32 %v442, %v363
    %v444 = vmul.f32 %v443, %v442
    %v445 = vmul.f32 0.5, %v444
    %v446 = vsub.f32 1.5, %v445
    %v447 = vmul.f32 %v442, %v446
    %vm448 = vweird.f32 %v363
    %vm449 = vweird.f32 %v442
    %vm450 = vmor %vm448, %vm449
    %v451 = vsel %vm450, %v442, %v447
    %v452 = vrsqrt.pop %v364
    %v453 = vmul.f32 %v452, %v364
    %v454 = vmul.f32 %v453, %v452
    %v455 = vmul.f32 0.5, %v454
    %v456 = vsub.f32 1.5, %v455
    %v457 = vmul.f32 %v452, %v456
    %vm458 = vweird.f32 %v364
    %vm459 = vweird.f32 %v452
    %vm460 = vmor %vm458, %vm459
    %v461 = vsel %vm460, %v452, %v457
    %v462 = vrsqrt.pop %v365
    %v463 = vmul.f32 %v462, %v365
    %v464 = vmul.f32 %v463, %v462
    %v465 = vmul.f32 0.5, %v464
    %v466 = vsub.f32 1.5, %v465
    %v467 = vmul.f32 %v462, %v466
    %vm468 = vweird.f32 %v365
    %vm469 = vweird.f32 %v462
    %vm470 = vmor %vm468, %vm469
    %v471 = vsel %vm470, %v462, %v467
    %v472 = vrsqrt.pop %v366
    %v473 = vmul.f32 %v472, %v366
    %v474 = vmul.f32 %v473, %v472
    %v475 = vmul.f32 0.5, %v474
    %v476 = vsub.f32 1.5, %v475
    %v477 = vmul.f32 %v472, %v476
    %vm478 = vweird.f32 %v366
    %vm479 = vweird.f32 %v472
    %vm480 = vmor %vm478, %vm479
    %v481 = vsel %vm480, %v472, %v477
    %v482 = vrsqrt.pop %v367
    %v483 = vmul.f32 %v482, %v367
    %v484 = vmul.f32 %v483, %v482
    %v485 = vmul.f32 0.5, %v484
    %v486 = vsub.f32 1.5, %v485
    %v487 = vmul.f32 %v482, %v486
    %vm488 = vweird.f32 %v367
    %vm489 = vweird.f32 %v482
    %vm490 = vmor %vm488, %vm489
    %v491 = vsel %vm490, %v482, %v487
    %v492 = vrsqrt.pop %v368
    %v493 = vmul.f32 %v492, %v368
    %v494 = vmul.f32 %v493, %v492
    %v495 = vmul.f32 0.5, %v494
    %v496 = vsub.f32 1.5, %v495
    %v497 = vmul.f32 %v492, %v496
    %vm498 = vweird.f32 %v368
    %vm499 = vweird.f32 %v492
    %vm500 = vmor %vm498, %vm499
    %v501 = vsel %vm500, %v492, %v497
    %v502 = vrsqrt.pop %v369
    %v503 = vmul.f32 %v502, %v369
    %v504 = vmul.f32 %v503, %v502
    %v505 = vmul.f32 0.5, %v504
    %v506 = vsub.f32 1.5, %v505
    %v507 = vmul.f32 %v502, %v506
    %vm508 = vweird.f32 %v369
    %vm509 = vweird.f32 %v502
    %vm510 = vmor %vm508, %vm509
    %v511 = vsel %vm510, %v502, %v507
    %v512 = vrsqrt.pop %v370
    %v513 = vmul.f32 %v512, %v370
    %v514 = vmul.f32 %v513, %v512
    %v515 = vmul.f32 0.5, %v514
    %v516 = vsub.f32 1.5, %v515
    %v517 = vmul.f32 %v512, %v516
    %vm518 = vweird.f32 %v370
    %vm519 = vweird.f32 %v512
    %vm520 = vmor %vm518, %vm519
    %v521 = vsel %vm520, %v512, %v517
    %v522 = vrsqrt.pop %v371
    %v523 = vmul.f32 %v522, %v371
    %v524 = vmul.f32 %v523, %v522
    %v525 = vmul.f32 0.5, %v524
    %v526 = vsub.f32 1.5, %v525
    %v527 = vmul.f32 %v522, %v526
    %vm528 = vweird.f32 %v371
    %vm529 = vweird.f32 %v522
    %vm530 = vmor %vm528, %vm529
    %v531 = vsel %vm530, %v522, %v527
    %v532 = vld [vmem:[%s3] sm:$0x1]
    %v534 = vperm.slane %v532, 0
    %v536 = vmul.f32 %v260, %v534
    %v537 = vmul.f32 %v261, %v534
    %v538 = vmul.f32 %v262, %v534
    %v539 = vmul.f32 %v263, %v534
    %v540 = vmul.f32 %v264, %v534
    %v541 = vmul.f32 %v265, %v534
    %v542 = vmul.f32 %v266, %v534
    %v543 = vmul.f32 %v267, %v534
    %v544 = vmul.f32 %v268, %v534
    %v545 = vmul.f32 %v269, %v534
    %v546 = vmul.f32 %v270, %v534
    %v547 = vmul.f32 %v271, %v534
    %v548 = vmul.f32 %v272, %v534
    %v549 = vmul.f32 %v273, %v534
    %v550 = vmul.f32 %v274, %v534
    %v551 = vmul.f32 %v275, %v534
    %v552 = vsel %vm99, %v536, 0.0
    %553 = vadd.xlane.f32.xlu0 %v552
    %v554 = vpop.xlane.xlu0 %553
    %v555 = vsel %vm99, %v537, 0.0
    %556 = vadd.xlane.f32.xlu0 %v555
    %v557 = vpop.xlane.xlu0 %556
    %v558 = vsel %vm99, %v538, 0.0
    %559 = vadd.xlane.f32.xlu0 %v558
    %v560 = vpop.xlane.xlu0 %559
    %v561 = vsel %vm99, %v539, 0.0
    %562 = vadd.xlane.f32.xlu0 %v561
    %v563 = vpop.xlane.xlu0 %562
    %v564 = vsel %vm99, %v540, 0.0
    %565 = vadd.xlane.f32.xlu0 %v564
    %v566 = vpop.xlane.xlu0 %565
    %v567 = vsel %vm99, %v541, 0.0
    %568 = vadd.xlane.f32.xlu0 %v567
    %v569 = vpop.xlane.xlu0 %568
    %v570 = vsel %vm99, %v542, 0.0
    %571 = vadd.xlane.f32.xlu0 %v570
    %v572 = vpop.xlane.xlu0 %571
    %v573 = vsel %vm99, %v543, 0.0
    %574 = vadd.xlane.f32.xlu0 %v573
    %v575 = vpop.xlane.xlu0 %574
    %v576 = vsel %vm99, %v544, 0.0
    %577 = vadd.xlane.f32.xlu0 %v576
    %v578 = vpop.xlane.xlu0 %577
    %v579 = vsel %vm99, %v545, 0.0
    %580 = vadd.xlane.f32.xlu0 %v579
    %v581 = vpop.xlane.xlu0 %580
    %v582 = vsel %vm99, %v546, 0.0
    %583 = vadd.xlane.f32.xlu0 %v582
    %v584 = vpop.xlane.xlu0 %583
    %v585 = vsel %vm99, %v547, 0.0
    %586 = vadd.xlane.f32.xlu0 %v585
    %v587 = vpop.xlane.xlu0 %586
    %v588 = vsel %vm99, %v548, 0.0
    %589 = vadd.xlane.f32.xlu0 %v588
    %v590 = vpop.xlane.xlu0 %589
    %v591 = vsel %vm99, %v549, 0.0
    %592 = vadd.xlane.f32.xlu0 %v591
    %v593 = vpop.xlane.xlu0 %592
    %v594 = vsel %vm99, %v550, 0.0
    %595 = vadd.xlane.f32.xlu0 %v594
    %v596 = vpop.xlane.xlu0 %595
    %v597 = vsel %vm99, %v551, 0.0
    %598 = vadd.xlane.f32.xlu0 %v597
    %v599 = vpop.xlane.xlu0 %598
    %v600 = vmul.f32 %v381, %v554
    %v601 = vmul.f32 %v391, %v557
    %v602 = vmul.f32 %v401, %v560
    %v603 = vmul.f32 %v411, %v563
    %v604 = vmul.f32 %v421, %v566
    %v605 = vmul.f32 %v431, %v569
    %v606 = vmul.f32 %v441, %v572
    %v607 = vmul.f32 %v451, %v575
    %v608 = vmul.f32 %v461, %v578
    %v609 = vmul.f32 %v471, %v581
    %v610 = vmul.f32 %v481, %v584
    %v611 = vmul.f32 %v491, %v587
    %v612 = vmul.f32 %v501, %v590
    %v613 = vmul.f32 %v511, %v593
    %v614 = vmul.f32 %v521, %v596
    %v615 = vmul.f32 %v531, %v599
    %s616 = sld [smem:[#allocation2]]
    %v617 = vstv %s616
    %v618 = vadd.f32 %v600, %v617
    %v619 = vadd.f32 %v601, %v617
    %v620 = vadd.f32 %v602, %v617
    %v621 = vadd.f32 %v603, %v617
    %v622 = vadd.f32 %v604, %v617
    %v623 = vadd.f32 %v605, %v617
    %v624 = vadd.f32 %v606, %v617
    %v625 = vadd.f32 %v607, %v617
    %v626 = vadd.f32 %v608, %v617
    %v627 = vadd.f32 %v609, %v617
    %v628 = vadd.f32 %v610, %v617
    %v629 = vadd.f32 %v611, %v617
    %v630 = vadd.f32 %v612, %v617
    %v631 = vadd.f32 %v613, %v617
    %v632 = vadd.f32 %v614, %v617
    %v633 = vadd.f32 %v615, %v617
    %v650 = vlaneseq
    %v651 = vand.u32 %v650, 127
    %v652 = vperm.slane %v618, %v651
    %v653 = vadd.s32 %v651, 4294967288
    %v654 = vperm.slane %v619, %v653
    %vm655 = vcmask 130112
    %v656 = vsel %vm655, %v654, %v652
    %v657 = vadd.s32 %v651, 4294967280
    %v658 = vperm.slane %v620, %v657
    %vm659 = vcmask 195712
    %v660 = vsel %vm659, %v658, %v656
    %v661 = vadd.s32 %v651, 4294967272
    %v662 = vperm.slane %v621, %v661
    %vm663 = vcmask 261312
    %v664 = vsel %vm663, %v662, %v660
    %v665 = vadd.s32 %v651, 4294967264
    %v666 = vperm.slane %v622, %v665
    %vm667 = vcmask 326912
    %v668 = vsel %vm667, %v666, %v664
    %v669 = vadd.s32 %v651, 4294967256
    %v670 = vperm.slane %v623, %v669
    %vm671 = vcmask 392512
    %v672 = vsel %vm671, %v670, %v668
    %v673 = vadd.s32 %v651, 4294967248
    %v674 = vperm.slane %v624, %v673
    %vm675 = vcmask 458112
    %v676 = vsel %vm675, %v674, %v672
    %v677 = vadd.s32 %v651, 4294967240
    %v678 = vperm.slane %v625, %v677
    %vm679 = vcmask 523712
    %v680 = vsel %vm679, %v678, %v676
    %v681 = vadd.s32 %v651, 4294967232
    %v682 = vperm.slane %v626, %v681
    %vm683 = vcmask 589312
    %v684 = vsel %vm683, %v682, %v680
    %v685 = vadd.s32 %v651, 4294967224
    %v686 = vperm.slane %v627, %v685
    %vm687 = vcmask 654912
    %v688 = vsel %vm687, %v686, %v684
    %v689 = vadd.s32 %v651, 4294967216
    %v690 = vperm.slane %v628, %v689
    %vm691 = vcmask 720512
    %v692 = vsel %vm691, %v690, %v688
    %v693 = vadd.s32 %v651, 4294967208
    %v694 = vperm.slane %v629, %v693
    %vm695 = vcmask 786112
    %v696 = vsel %vm695, %v694, %v692
    %v697 = vadd.s32 %v651, 4294967200
    %v698 = vperm.slane %v630, %v697
    %vm699 = vcmask 851712
    %v700 = vsel %vm699, %v698, %v696
    %v701 = vadd.s32 %v651, 4294967192
    %v702 = vperm.slane %v631, %v701
    %vm703 = vcmask 917312
    %v704 = vsel %vm703, %v702, %v700
    %v705 = vadd.s32 %v651, 4294967184
    %v706 = vperm.slane %v632, %v705
    %vm707 = vcmask 982912
    %v708 = vsel %vm707, %v706, %v704
    %v709 = vadd.s32 %v651, 4294967176
    %v710 = vperm.slane %v633, %v709
    %vm711 = vcmask 1048512
    %v712 = vsel %vm711, %v710, %v708
    %714 = vst [vmem:[#allocation3] sm:$0x1] %v712
    // Predicated region
    $region22: #{tpu_custom_call.1} parent=1 // pred_check
      _
    $region23: #{tpu_custom_call.1} parent=1 // pred_check_branch
      %716 = sbr.rel (0) target = $region25
    $region24: #{tpu_custom_call.1} parent=1 // pred_region
      %718 = vsyncadd [#allocation4], 0
      %s720 = sshll.u32 [#allocation3], 4
      %s721 = int_to_ptr.vmem [resolvable:$true] %s720
      %s722 = sshll.u32 %s5, 4
      %s723 = int_to_ptr.hbm [resolvable:$true] %s722
      %725 = dma.vmem_to_hbm [thread:$0]  %s721, 16, %s723, [#allocation4]
    $region25: #{tpu_custom_call.1} parent=1 // pred_fallthru
      _
    // Predicated region
    $region26: #{tpu_custom_call.1} parent=1 // pred_check
      _
    $region27: #{tpu_custom_call.1} parent=1 // pred_check_branch
      %727 = sbr.rel (0) target = $region29
    $region28: #{tpu_custom_call.1} parent=1 // pred_region
      %729 = dma.done [#allocation4], 16
    $region29: #{tpu_custom_call.1} parent=1 // pred_fallthru
      _
    %730 = vsyncpa [#allocation4], 1

</llo_original>
